<compile_context>
chip_gen: v7x
topology: tpu7x:2x2x1
jax: 0.10.0
libtpu: 0.0.40
codegen_flags: <defaults>
</compile_context>

<pallas_src>
import functools

import numpy as np
import jax
import jax.numpy as jnp
from jax.experimental import pallas as pl
from jax.experimental.pallas import tpu as pltpu

_LANE = 128
_HPAD = 8          # attention-head columns padded to one sublane group


# ---------------------------------------------------------------------------
# small helpers
# ---------------------------------------------------------------------------
def _round_up(n, m):
    return ((n + m - 1) // m) * m


def _pick_tile(n, candidates):
    for c in candidates:
        if c <= n and n % c == 0:
            return c
    return n


def _vmem_capacity_bytes():
    try:
        cap = int(getattr(pltpu.get_tpu_info(), "vmem_capacity_bytes", 0))
    except Exception:
        cap = 0
    return cap if cap > 0 else 64 * 1024 * 1024


def _compiler_params(dimension_semantics):
    cap = _vmem_capacity_bytes()
    limit = int(min((cap * 3) // 4, 96 * 1024 * 1024))
    return pltpu.CompilerParams(dimension_semantics=dimension_semantics,
                                vmem_limit_bytes=limit)


def _attention_tiles(np_nodes):
    """Generation-aware (target tm, source ts) attention tiles."""
    cap = _vmem_capacity_bytes()
    if cap >= 100 * 1024 * 1024:             # v5e / v6e: 128 MiB VMEM, single TC
        tm_cands, ts_cands, min_tb = (512, 256, 128), (1024, 512, 256, 128), 1
    else:                                    # v7x: 64 MiB VMEM, 2 TensorCores
        tm_cands, ts_cands, min_tb = (256, 128), (512, 256, 128), 2
    tm = None
    for c in tm_cands:                       # prefer >= min_tb target blocks (megacore)
        if np_nodes % c == 0 and np_nodes // c >= min_tb:
            tm = c
            break
    if tm is None:
        tm = _pick_tile(np_nodes, tm_cands)
    ts = _pick_tile(np_nodes, ts_cands)
    return tm, ts


def _block_flags(adj_i8, tm, ts):
    """Per-(target block, source block) 'any edge' flags, computed once per graph."""
    np_nodes = adj_i8.shape[0]
    n_tb, n_sb = np_nodes // tm, np_nodes // ts
    return (adj_i8.reshape(n_tb, tm, n_sb, ts) != 0).any(axis=(1, 3)).astype(jnp.int32)


# ---------------------------------------------------------------------------
# Kernel 1: fused node transform (single bf16 MXU matmul per row block)
#   hc = x @ [Wgat | Wlin | Wed | Wes]
#     -> h (bf16 per-head feats), skip (+ both biases, f32), [e_dst | e_src] (N, 16)
# ---------------------------------------------------------------------------
def _transform_kernel(x_ref, wcat_ref, b_ref, h_ref, skip_ref, eds_ref, *, hf, out_dim):
    hc = jnp.dot(x_ref[...], wcat_ref[...], preferred_element_type=jnp.float32)
    h_ref[...] = hc[:, :hf].astype(h_ref.dtype)                   # (TM, H*F) bf16
    skip_ref[...] = hc[:, hf:hf + out_dim] + b_ref[...]           # (TM, out_dim) f32
    eds_ref[...] = hc[:, hf + out_dim:]                           # (TM, 16): [e_dst|e_src]


# ---------------------------------------------------------------------------
# Kernel 2: blocked GAT attention + skip + (optional) ELU
#   grid = (target blocks [parallel], source blocks [arbitrary, reduction last])
#   Softmax uses the precomputed per-(head, target) upper-bound shift m, so the only
#   cross-block state is the per-head denominator l and the weighted-sum accumulator.
# ---------------------------------------------------------------------------
def _attention_kernel(flags_ref, edst_ref, m_ref, esrc_ref, h_ref, adj_ref, skip_ref,
                      out_ref, l_sc, acc_sc, *, heads, fout, concat, apply_elu):
    ti = pl.program_id(0)
    si = pl.program_id(1)

    @pl.when(si == 0)
    def _init():
        l_sc[...] = jnp.zeros_like(l_sc)
        acc_sc[...] = jnp.zeros_like(acc_sc)

    @pl.when(flags_ref[ti, si] > 0)          # skip compute for edge-free blocks
    def _compute():
        mask = adj_ref[...] > 0                              # (TM, TS) from int8
        for hd in range(heads):                              # static; lane-aligned slices
            ed = edst_ref[:, hd:hd + 1]                      # (TM, 1)  target-side e
            m = m_ref[:, hd:hd + 1]                          # (TM, 1)  softmax shift
            es = esrc_ref[hd:hd + 1, :]                      # (1, TS)  source-side e
            s = ed + es                                      # (TM, TS) raw logits
            s = jnp.maximum(s, 0.2 * s)                      # LeakyReLU(0.2)
            p = jnp.where(mask, jnp.exp(s - m), 0.0)         # masked, <= 1
            l_sc[:, hd:hd + 1] += jnp.sum(p, axis=1, keepdims=True)
            sl = slice(hd * fout, (hd + 1) * fout)
            acc_sc[:, sl] += jnp.dot(p.astype(jnp.bfloat16), h_ref[:, sl],
                                     preferred_element_type=jnp.float32)

    @pl.when(si == pl.num_programs(1) - 1)
    def _finalize():
        def _act(v):
            if apply_elu:
                return jnp.where(v > 0, v, jnp.exp(jnp.minimum(v, 0.0)) - 1.0)
            return v

        if concat:
            for hd in range(heads):
                sl = slice(hd * fout, (hd + 1) * fout)
                l = l_sc[:, hd:hd + 1]
                inv = jnp.where(l > 0, pl.reciprocal(l, approx=True), 0.0)
                v = acc_sc[:, sl] * inv + skip_ref[:, sl]
                out_ref[:, sl] = _act(v).astype(out_ref.dtype)
        else:
            l = l_sc[:, 0:1]
            inv = jnp.where(l > 0, pl.reciprocal(l, approx=True), 0.0)
            gat = acc_sc[:, 0:fout] * inv
            for hd in range(1, heads):
                l = l_sc[:, hd:hd + 1]
                inv = jnp.where(l > 0, pl.reciprocal(l, approx=True), 0.0)
                gat = gat + acc_sc[:, hd * fout:(hd + 1) * fout] * inv
            v = gat * (1.0 / heads) + skip_ref[...]
            out_ref[...] = _act(v).astype(out_ref.dtype)


# ---------------------------------------------------------------------------
# One fused layer: GATConv(x, adj) + Linear(x) [+ ELU]
# ---------------------------------------------------------------------------
def gat_layer(x, adj_i8, flags, lp, tm, ts, *, apply_elu, out_dtype):
    np_nodes, fin = x.shape
    heads, fout, concat = lp["heads"], lp["fout"], lp["concat"]
    out_dim = lp["out_dim"]
    hf = heads * fout
    w_cat, b = lp["w_cat"], lp["b"]
    total_cols = w_cat.shape[1]
    assert fin == w_cat.shape[0]
    assert np_nodes % tm == 0 and np_nodes % ts == 0

    # ---- kernel 1: fused transform ----
    tmt = _pick_tile(np_nodes, (512, 256, 128))
    n_rows = np_nodes // tmt
    h, skip, eds = pl.pallas_call(
        functools.partial(_transform_kernel, hf=hf, out_dim=out_dim),
        grid=(n_rows,),
        in_specs=[
            pl.BlockSpec((tmt, fin), lambda i: (i, 0)),
            pl.BlockSpec((fin, total_cols), lambda i: (0, 0)),
            pl.BlockSpec((1, out_dim), lambda i: (0, 0)),
        ],
        out_specs=[
            pl.BlockSpec((tmt, hf), lambda i: (i, 0)),
            pl.BlockSpec((tmt, out_dim), lambda i: (i, 0)),
            pl.BlockSpec((tmt, 2 * _HPAD), lambda i: (i, 0)),
        ],
        out_shape=(
            jax.ShapeDtypeStruct((np_nodes, hf), jnp.bfloat16),
            jax.ShapeDtypeStruct((np_nodes, out_dim), jnp.float32),
            jax.ShapeDtypeStruct((np_nodes, 2 * _HPAD), jnp.float32),
        ),
        compiler_params=_compiler_params(("parallel",)),
    )(x, w_cat, b)

    # ---- tiny XLA glue, O(N * 8): split e projections, safe softmax shift, layouts ----
    edst = eds[:, :_HPAD]                                 # (Np, 8) target-side e
    esrc = eds[:, _HPAD:]                                 # (Np, 8) source-side e
    gmax = jnp.max(esrc, axis=0, keepdims=True)           # per-head global upper bound
    t = edst + gmax
    mrow = jnp.maximum(t, 0.2 * t)                        # LeakyReLU -> upper-bound shift
    esrc_t = jnp.transpose(esrc)                          # (8, Np) lane-major for kernel 2

    # ---- kernel 2: blocked masked attention + skip (+ ELU) ----
    n_tb, n_sb = np_nodes // tm, np_nodes // ts
    grid_spec = pltpu.PrefetchScalarGridSpec(
        num_scalar_prefetch=1,
        grid=(n_tb, n_sb),
        in_specs=[
            pl.BlockSpec((tm, _HPAD), lambda ti, si, flg: (ti, 0)),     # e_dst
            pl.BlockSpec((tm, _HPAD), lambda ti, si, flg: (ti, 0)),     # softmax shift m
            pl.BlockSpec((_HPAD, ts), lambda ti, si, flg: (0, si)),     # e_src
            pl.BlockSpec((ts, hf), lambda ti, si, flg: (si, 0)),        # h (bf16 source feats)
            pl.BlockSpec((tm, ts), lambda ti, si, flg: (ti, si)),       # adjacency (int8)
            pl.BlockSpec((tm, out_dim), lambda ti, si, flg: (ti, 0)),   # skip + biases
        ],
        out_specs=pl.BlockSpec((tm, out_dim), lambda ti, si, flg: (ti, 0)),
        scratch_shapes=[
            pltpu.VMEM((tm, _HPAD), jnp.float32),     # per-head softmax denominators
            pltpu.VMEM((tm, hf), jnp.float32),        # per-head weighted sums
        ],
    )
    y = pl.pallas_call(
        functools.partial(_attention_kernel, heads=heads, fout=fout,
                          concat=concat, apply_elu=apply_elu),
        grid_spec=grid_spec,
        out_shape=jax.ShapeDtypeStruct((np_nodes, out_dim), out_dtype),
        compiler_params=_compiler_params(("parallel", "arbitrary")),
    )(flags, edst, mrow, esrc_t, h, adj_i8, skip)
    return y


# ---------------------------------------------------------------------------
# Parameter init (raw, for the reference) and host-side parameter fusion
# ---------------------------------------------------------------------------
def _init_linear(key, fan_in, fan_out):
    kw, kb = jax.random.split(key)
    w = jax.random.normal(kw, (fan_in, fan_out), jnp.float32) / np.sqrt(fan_in)
    b = jax.random.normal(kb, (1, fan_out), jnp.float32) * 0.01
    return w, b


def _init_gatconv(key, fan_in, fout, heads, concat):
    kw, ks, kd, kb = jax.random.split(key, 4)
    w = jax.random.normal(kw, (fan_in, heads * fout), jnp.float32) / np.sqrt(fan_in)
    a_src = jax.random.normal(ks, (heads, fout), jnp.float32) / np.sqrt(fout)
    a_dst = jax.random.normal(kd, (heads, fout), jnp.float32) / np.sqrt(fout)
    out_dim = heads * fout if concat else fout
    b = jax.random.normal(kb, (1, out_dim), jnp.float32) * 0.01
    return w, a_src, a_dst, b


def init_gat_params(key, nfeat, nclass):
    keys = jax.random.split(key, 6)
    return {
        "conv1": _init_gatconv(keys[0], nfeat, 256, 4, True),
        "lin1": _init_linear(keys[1], nfeat, 4 * 256),
        "conv2": _init_gatconv(keys[2], 4 * 256, 256, 4, True),
        "lin2": _init_linear(keys[3], 4 * 256, 4 * 256),
        "conv3": _init_gatconv(keys[4], 4 * 256, nclass, 6, False),
        "lin3": _init_linear(keys[5], 4 * 256, nclass),
    }


def _fuse_layer_params(wg, a_src, a_dst, bg, wl, bl, *, heads, fout, concat):
    """Pre-fuse (once, host-side): [Wgat | Wlin | Wed | Wes] bf16, combined bias,
    with per-head / input-feature lane padding."""
    fin = wg.shape[0]
    fin_pad = _round_up(fin, _LANE)
    fout_pad = _round_up(fout, _LANE)
    if concat and fout_pad != fout:
        raise ValueError("concat=True layers require fout to be a multiple of 128")

    wg3 = jnp.pad(wg.reshape(fin, heads, fout), ((0, 0), (0, 0), (0, fout_pad - fout)))
    a_src_p = jnp.pad(a_src, ((0, 0), (0, fout_pad - fout)))
    a_dst_p = jnp.pad(a_dst, ((0, 0), (0, fout_pad - fout)))
    # fold attention vectors into x-side weights: (x @ Wg_h) . a_h == x @ (Wg_h @ a_h)
    w_ed = jnp.pad(jnp.einsum("fhk,hk->fh", wg3, a_dst_p), ((0, 0), (0, _HPAD - heads)))
    w_es = jnp.pad(jnp.einsum("fhk,hk->fh", wg3, a_src_p), ((0, 0), (0, _HPAD - heads)))
    wg_p = wg3.reshape(fin, heads * fout_pad)

    if concat:
        wl_p, bl_p, bg_p = wl, bl, bg
        out_dim = heads * fout_pad
    else:
        wl_p = jnp.pad(wl, ((0, 0), (0, fout_pad - fout)))
        bl_p = jnp.pad(bl, ((0, 0), (0, fout_pad - fout)))
        bg_p = jnp.pad(bg, ((0, 0), (0, fout_pad - fout)))
        out_dim = fout_pad

    w_cat = jnp.concatenate([wg_p, wl_p, w_ed, w_es], axis=1)
    w_cat = jnp.pad(w_cat, ((0, fin_pad - fin), (0, 0))).astype(jnp.bfloat16)
    b = (bg_p + bl_p).astype(jnp.float32)
    return dict(w_cat=w_cat, b=b, heads=heads, fout=fout_pad, concat=concat,
                out_dim=out_dim, fin=fin, fin_pad=fin_pad)


def fuse_gat_params(params, nclass):
    return {
        "l1": _fuse_layer_params(*params["conv1"], *params["lin1"],
                                 heads=4, fout=256, concat=True),
        "l2": _fuse_layer_params(*params["conv2"], *params["lin2"],
                                 heads=4, fout=256, concat=True),
        "l3": _fuse_layer_params(*params["conv3"], *params["lin3"],
                                 heads=6, fout=nclass, concat=False),
    }


# ---------------------------------------------------------------------------
# Full GAT forward (3 fused layers)
# ---------------------------------------------------------------------------
def gat_forward(x, adj_i8, fused, nclass):
    n, nfeat = x.shape
    np_nodes = adj_i8.shape[0]
    tm, ts = _attention_tiles(np_nodes)
    flags = _block_flags(adj_i8, tm, ts)              # once, shared by all 3 layers

    fin_pad = fused["l1"]["fin_pad"]
    xp = jnp.zeros((np_nodes, fin_pad), jnp.bfloat16)
    xp = xp.at[:n, :nfeat].set(x.astype(jnp.bfloat16))

    h = gat_layer(xp, adj_i8, flags, fused["l1"], tm, ts,
                  apply_elu=True, out_dtype=jnp.bfloat16)
    h = gat_layer(h, adj_i8, flags, fused["l2"], tm, ts,
                  apply_elu=True, out_dtype=jnp.bfloat16)
    h = gat_layer(h, adj_i8, flags, fused["l3"], tm, ts,
                  apply_elu=False, out_dtype=jnp.float32)
    return h[:n, :nclass]


def edge_index_to_adj(edge_index, num_nodes, padded_nodes):
    """Dense int8 mask adj[target, source]; self loops on real nodes only."""
    src = np.asarray(edge_index[0])
    dst = np.asarray(edge_index[1])
    adj = np.zeros((padded_nodes, padded_nodes), np.int8)
    adj[dst, src] = 1
    idx = np.arange(num_nodes)
    adj[idx, idx] = 1
    return jnp.asarray(adj)


# ---------------------------------------------------------------------------
# Pure-numpy (float64) reference for correctness checking
# ---------------------------------------------------------------------------
def _gat_layer_ref(x, adj, wg, a_src, a_dst, bg, wl, bl, heads, fout, concat, apply_elu):
    h = x @ wg
    outs = []
    for hd in range(heads):
        hh = h[:, hd * fout:(hd + 1) * fout]
        es = hh @ a_src[hd]
        ed = hh @ a_dst[hd]
        logits = ed[:, None] + es[None, :]
        logits = np.where(logits > 0, logits, 0.2 * logits)
        masked = np.where(adj > 0, logits, -np.inf)
        m = masked.max(axis=1, keepdims=True)
        p = np.exp(masked - m) * adj
        alpha = p / p.sum(axis=1, keepdims=True)
        outs.append(alpha @ hh)
    gat = np.concatenate(outs, 1) if concat else sum(outs) / heads
    y = gat + bg + x @ wl + bl
    if apply_elu:
        y = np.where(y > 0, y, np.exp(np.minimum(y, 0.0)) - 1.0)
    return y


def gat_forward_ref(x, adj_i8, params, nclass, num_nodes):
    f64 = lambda t: tuple(np.asarray(a, np.float64) for a in t)
    p = {k: f64(v) for k, v in params.items()}
    xr = np.asarray(x, np.float64)
    adj = np.asarray(adj_i8)[:num_nodes, :num_nodes].astype(np.float64)
    x1 = _gat_layer_ref(xr, adj, *p["conv1"], *p["lin1"], 4, 256, True, True)
    x2 = _gat_layer_ref(x1, adj, *p["conv2"], *p["lin2"], 4, 256, True, True)
    x3 = _gat_layer_ref(x2, adj, *p["conv3"], *p["lin3"], 6, nclass, False, False)
    return x3


# ---------------------------------------------------------------------------
if __name__ == "__main__":
    N, NFEAT, NCLASS, E = 16, 64, 128, 48

    key = jax.random.PRNGKey(0)
    kx, ksrc, kdst, kparams = jax.random.split(key, 4)

    x = jax.random.normal(kx, (N, NFEAT), jnp.float32)
    src = jax.random.randint(ksrc, (E,), 0, N)
    dst = jax.random.randint(kdst, (E,), 0, N)
    edge_index = jnp.stack([src, dst])                  # (2, E), PyG convention

    n_pad = _round_up(N, _LANE)                         # lane-dense node dimension
    adj = edge_index_to_adj(edge_index, N, n_pad)       # (Np, Np) int8 mask

    params = init_gat_params(kparams, NFEAT, NCLASS)    # raw params (reference)
    fused = fuse_gat_params(params, NCLASS)             # fused/padded kernel params (once)

    out = gat_forward(x, adj, fused, NCLASS)
    out = jax.block_until_ready(out)

    assert out.shape == (N, NCLASS)
    assert bool(jnp.all(jnp.isfinite(out)))

    ref = gat_forward_ref(x, adj, params, NCLASS, N)
    np.testing.assert_allclose(np.asarray(out, np.float64), ref, rtol=5e-2, atol=5e-2)

    print("KERNEL_OK")
</pallas_src>

<mosaic_0001>
module attributes {stable_mosaic.version = 11 : i64} {
  func.func @_transform_kernel(%arg0: i32, %arg1: memref<128x128xbf16, #tpu.memory_space<vmem>>, %arg2: memref<128x2064xbf16, #tpu.memory_space<vmem>>, %arg3: memref<1x1024xf32, #tpu.memory_space<vmem>>, %arg4: memref<128x1024xbf16, #tpu.memory_space<vmem>>, %arg5: memref<128x1024xf32, #tpu.memory_space<vmem>>, %arg6: memref<128x16xf32, #tpu.memory_space<vmem>>) attributes {dimension_semantics = [#tpu.dimension_semantics<parallel>], iteration_bounds = array<i64: 1>, scalar_prefetch = 0 : i64, scratch_operands = 0 : i64, tpu.core_type = #tpu.core_type<tc>, window_params = [{transform_indices = @transform_0, window_bounds = array<i64: 128, 128>}, {pipeline_mode = #tpu.pipeline_mode<synchronous>, transform_indices = @transform_1, window_bounds = array<i64: 128, 2064>}, {pipeline_mode = #tpu.pipeline_mode<synchronous>, transform_indices = @transform_2, window_bounds = array<i64: 1, 1024>}, {transform_indices = @transform_3, window_bounds = array<i64: 128, 1024>}, {transform_indices = @transform_4, window_bounds = array<i64: 128, 1024>}, {transform_indices = @transform_5, window_bounds = array<i64: 128, 16>}]} {
    %c0 = arith.constant 0 : index
    %c0_0 = arith.constant 0 : index
    %0 = vector.load %arg1[%c0, %c0_0] : memref<128x128xbf16, #tpu.memory_space<vmem>>, vector<128x128xbf16>
    %c0_1 = arith.constant 0 : index
    %c0_2 = arith.constant 0 : index
    %1 = vector.load %arg2[%c0_1, %c0_2] : memref<128x2064xbf16, #tpu.memory_space<vmem>>, vector<128x2064xbf16>
    %cst = arith.constant dense<0.000000e+00> : vector<128x2064xf32>
    %2 = tpu.matmul %0, %1, %cst {dimension_numbers = #tpu.dot_dimension_numbers<[1], [0], [0], [1], [0, 0, 1, 1], [], []>} : vector<128x128xbf16>, vector<128x2064xbf16>, vector<128x2064xf32> -> vector<128x2064xf32>
    %3 = vector.extract_strided_slice %2 {offsets = [0, 0], sizes = [128, 1024], strides = [1, 1]} : vector<128x2064xf32> to vector<128x1024xf32>
    %4 = arith.truncf %3 : vector<128x1024xf32> to vector<128x1024xbf16>
    %c0_3 = arith.constant 0 : index
    %c0_4 = arith.constant 0 : index
    %5 = vector.load %arg4[%c0_3, %c0_4] : memref<128x1024xbf16, #tpu.memory_space<vmem>>, vector<128x1024xbf16>
    tpu.vector_store %arg4[%c0_3, %c0_4], %4 {strides = array<i32>} : memref<128x1024xbf16, #tpu.memory_space<vmem>>, vector<128x1024xbf16>,
    %6 = vector.extract_strided_slice %2 {offsets = [0, 1024], sizes = [128, 1024], strides = [1, 1]} : vector<128x2064xf32> to vector<128x1024xf32>
    %c0_5 = arith.constant 0 : index
    %c0_6 = arith.constant 0 : index
    %7 = vector.load %arg3[%c0_5, %c0_6] : memref<1x1024xf32, #tpu.memory_space<vmem>>, vector<1x1024xf32>
    %8 = vector.broadcast %7 : vector<1x1024xf32> to vector<128x1024xf32>
    %9 = arith.addf %6, %8 : vector<128x1024xf32>
    %c0_7 = arith.constant 0 : index
    %c0_8 = arith.constant 0 : index
    %10 = vector.load %arg5[%c0_7, %c0_8] : memref<128x1024xf32, #tpu.memory_space<vmem>>, vector<128x1024xf32>
    tpu.vector_store %arg5[%c0_7, %c0_8], %9 {strides = array<i32>} : memref<128x1024xf32, #tpu.memory_space<vmem>>, vector<128x1024xf32>,
    %11 = vector.extract_strided_slice %2 {offsets = [0, 2048], sizes = [128, 16], strides = [1, 1]} : vector<128x2064xf32> to vector<128x16xf32>
    %c0_9 = arith.constant 0 : index
    %c0_10 = arith.constant 0 : index
    %12 = vector.load %arg6[%c0_9, %c0_10] : memref<128x16xf32, #tpu.memory_space<vmem>>, vector<128x16xf32>
    tpu.vector_store %arg6[%c0_9, %c0_10], %11 {strides = array<i32>} : memref<128x16xf32, #tpu.memory_space<vmem>>, vector<128x16xf32>,
    return
  }
  func.func @transform_0(%arg0: i32) -> (i32, i32) {
    %c0_i32 = arith.constant 0 : i32
    %c0_i32_0 = arith.constant 0 : i32
    return %arg0, %c0_i32 : i32, i32
  }
  func.func @transform_1(%arg0: i32) -> (i32, i32) {
    %c0_i32 = arith.constant 0 : i32
    %c0_i32_0 = arith.constant 0 : i32
    %c0_i32_1 = arith.constant 0 : i32
    return %c0_i32, %c0_i32_0 : i32, i32
  }
  func.func @transform_2(%arg0: i32) -> (i32, i32) {
    %c0_i32 = arith.constant 0 : i32
    %c0_i32_0 = arith.constant 0 : i32
    %c0_i32_1 = arith.constant 0 : i32
    return %c0_i32, %c0_i32_0 : i32, i32
  }
  func.func @transform_3(%arg0: i32) -> (i32, i32) {
    %c0_i32 = arith.constant 0 : i32
    %c0_i32_0 = arith.constant 0 : i32
    return %arg0, %c0_i32 : i32, i32
  }
  func.func @transform_4(%arg0: i32) -> (i32, i32) {
    %c0_i32 = arith.constant 0 : i32
    %c0_i32_0 = arith.constant 0 : i32
    return %arg0, %c0_i32 : i32, i32
  }
  func.func @transform_5(%arg0: i32) -> (i32, i32) {
    %c0_i32 = arith.constant 0 : i32
    %c0_i32_0 = arith.constant 0 : i32
    return %arg0, %c0_i32 : i32, i32
  }
}

</mosaic_0001>

<llo_original>
// kernel: tpu_custom_call.1
$region0: #{tpu_custom_call.1}
  #allocation0 [shape = 'u32[]', space=smem, size = 0x4, offset = 0x4, fixed_abs, tag = 'smem constant byte address 0x4 - core index']
  #allocation1 [shape = 'u32[144,128]{1,0:T(1,128)}', space=vmem, size = 0x12000, scoped, tag = 'internal scratch']
  %s0 = inlined_call_operand.vmem [shape: bf16[128,128], index: 0, kind: input, shape index: {}]
  %s1 = inlined_call_operand.vmem [shape: bf16[128,2064], index: 1, kind: input, shape index: {}]
  %s2 = inlined_call_operand.vmem [shape: f32[1,1024], index: 2, kind: input, shape index: {}]
  %s3 = inlined_call_operand.hbm [shape: bf16[128,1024], index: 3, kind: output, shape index: {0}]
  %s4 = inlined_call_operand.hbm [shape: f32[128,1024], index: 4, kind: output, shape index: {1}]
  %s5 = inlined_call_operand.vmem [shape: f32[128,16], index: 5, kind: output, shape index: {2}]
  %6 = xla_tuple %s3, %s4, %s5
  %s7 = sld [smem:[#allocation0]]
  $region38: #{tpu_custom_call.1} parent=0
    _
  %s9 = ssub.s32 1, %s7
  %s10 = scalar_select 0, %s9, %s7
  $region1: #{tpu_custom_call.1} parent=0
    #allocation2 [shape = 'u8[262144]{0}', space=vmem, size = 0x40000, scoped, tag = 'output window, operand 0, single buffered']
    #allocation3 [shape = 's32[1]{0}', space=sflag, size = 0x4, scoped, tag = 'scoped memory for tpu_custom_call.1']
    #allocation4 [shape = 'u8[524288]{0}', space=vmem, size = 0x80000, scoped, tag = 'output window, operand 1, single buffered']
    #allocation5 [shape = 's32[1]{0}', space=sflag, size = 0x4, scoped, tag = 'scoped memory for tpu_custom_call.1']
    %11 = vsyncpa [#allocation3], 0
    %12 = vsyncpa [#allocation5], 0
    // Predicated region
    $region2: #{tpu_custom_call.1} parent=1 // pred_check
      _
    $region3: #{tpu_custom_call.1} parent=1 // pred_check_branch
      %14 = sbr.rel (0) target = $region5
    $region4: #{tpu_custom_call.1} parent=1 // pred_region
      _
    $region5: #{tpu_custom_call.1} parent=1 // pred_fallthru
      _
    // Predicated region
    $region6: #{tpu_custom_call.1} parent=1 // pred_check
      _
    $region7: #{tpu_custom_call.1} parent=1 // pred_check_branch
      %16 = sbr.rel (0) target = $region9
    $region8: #{tpu_custom_call.1} parent=1 // pred_region
      _
    $region9: #{tpu_custom_call.1} parent=1 // pred_fallthru
      _
    // Predicated region
    $region10: #{tpu_custom_call.1} parent=1 // pred_check
      _
    $region11: #{tpu_custom_call.1} parent=1 // pred_check_branch
      %18 = sbr.rel (0) target = $region13
    $region12: #{tpu_custom_call.1} parent=1 // pred_region
      _
    $region13: #{tpu_custom_call.1} parent=1 // pred_fallthru
      _
    %v20 = vld [vmem:[%s0] sm:$0xf]
    %v21 = vld [vmem:[%s0 + $0x4] sm:$0xf]
    %v22 = vld [vmem:[%s0 + $0x8] sm:$0xf]
    %v23 = vld [vmem:[%s0 + $0xc] sm:$0xf]
    %v24 = vld [vmem:[%s0 + $0x10] sm:$0xf]
    %v25 = vld [vmem:[%s0 + $0x14] sm:$0xf]
    %v26 = vld [vmem:[%s0 + $0x18] sm:$0xf]
    %v27 = vld [vmem:[%s0 + $0x1c] sm:$0xf]
    %v28 = vld [vmem:[%s0 + $0x20] sm:$0xf]
    %v29 = vld [vmem:[%s0 + $0x24] sm:$0xf]
    %v30 = vld [vmem:[%s0 + $0x28] sm:$0xf]
    %v31 = vld [vmem:[%s0 + $0x2c] sm:$0xf]
    %v32 = vld [vmem:[%s0 + $0x30] sm:$0xf]
    %v33 = vld [vmem:[%s0 + $0x34] sm:$0xf]
    %v34 = vld [vmem:[%s0 + $0x38] sm:$0xf]
    %v35 = vld [vmem:[%s0 + $0x3c] sm:$0xf]
    %v36 = vld [vmem:[%s1] sm:$0xff]
    %v37 = vld [vmem:[%s1 + $0x8] sm:$0xff]
    %v38 = vld [vmem:[%s1 + $0x10] sm:$0xff]
    %v39 = vld [vmem:[%s1 + $0x18] sm:$0xff]
    %v40 = vld [vmem:[%s1 + $0x20] sm:$0xff]
    %v41 = vld [vmem:[%s1 + $0x28] sm:$0xff]
    %v42 = vld [vmem:[%s1 + $0x30] sm:$0xff]
    %v43 = vld [vmem:[%s1 + $0x38] sm:$0xff]
    %v44 = vld [vmem:[%s1 + $0x40] sm:$0xf]
    %v45 = vld [vmem:[%s1 + $0x44] sm:$0xff]
    %v46 = vld [vmem:[%s1 + $0x4c] sm:$0xff]
    %v47 = vld [vmem:[%s1 + $0x54] sm:$0xff]
    %v48 = vld [vmem:[%s1 + $0x5c] sm:$0xff]
    %v49 = vld [vmem:[%s1 + $0x64] sm:$0xff]
    %v50 = vld [vmem:[%s1 + $0x6c] sm:$0xff]
    %v51 = vld [vmem:[%s1 + $0x74] sm:$0xff]
    %v52 = vld [vmem:[%s1 + $0x7c] sm:$0xff]
    %v53 = vld [vmem:[%s1 + $0x84] sm:$0xf]
    %v54 = vld [vmem:[%s1 + $0x88] sm:$0xff]
    %v55 = vld [vmem:[%s1 + $0x90] sm:$0xff]
    %v56 = vld [vmem:[%s1 + $0x98] sm:$0xff]
    %v57 = vld [vmem:[%s1 + $0xa0] sm:$0xff]
    %v58 = vld [vmem:[%s1 + $0xa8] sm:$0xff]
    %v59 = vld [vmem:[%s1 + $0xb0] sm:$0xff]
    %v60 = vld [vmem:[%s1 + $0xb8] sm:$0xff]
    %v61 = vld [vmem:[%s1 + $0xc0] sm:$0xff]
    %v62 = vld [vmem:[%s1 + $0xc8] sm:$0xf]
    %v63 = vld [vmem:[%s1 + $0xcc] sm:$0xff]
    %v64 = vld [vmem:[%s1 + $0xd4] sm:$0xff]
    %v65 = vld [vmem:[%s1 + $0xdc] sm:$0xff]
    %v66 = vld [vmem:[%s1 + $0xe4] sm:$0xff]
    %v67 = vld [vmem:[%s1 + $0xec] sm:$0xff]
    %v68 = vld [vmem:[%s1 + $0xf4] sm:$0xff]
    %v69 = vld [vmem:[%s1 + $0xfc] sm:$0xff]
    %v70 = vld [vmem:[%s1 + $0x104] sm:$0xff]
    %v71 = vld [vmem:[%s1 + $0x10c] sm:$0xf]
    %v72 = vld [vmem:[%s1 + $0x110] sm:$0xff]
    %v73 = vld [vmem:[%s1 + $0x118] sm:$0xff]
    %v74 = vld [vmem:[%s1 + $0x120] sm:$0xff]
    %v75 = vld [vmem:[%s1 + $0x128] sm:$0xff]
    %v76 = vld [vmem:[%s1 + $0x130] sm:$0xff]
    %v77 = vld [vmem:[%s1 + $0x138] sm:$0xff]
    %v78 = vld [vmem:[%s1 + $0x140] sm:$0xff]
    %v79 = vld [vmem:[%s1 + $0x148] sm:$0xff]
    %v80 = vld [vmem:[%s1 + $0x150] sm:$0xf]
    %v81 = vld [vmem:[%s1 + $0x154] sm:$0xff]
    %v82 = vld [vmem:[%s1 + $0x15c] sm:$0xff]
    %v83 = vld [vmem:[%s1 + $0x164] sm:$0xff]
    %v84 = vld [vmem:[%s1 + $0x16c] sm:$0xff]
    %v85 = vld [vmem:[%s1 + $0x174] sm:$0xff]
    %v86 = vld [vmem:[%s1 + $0x17c] sm:$0xff]
    %v87 = vld [vmem:[%s1 + $0x184] sm:$0xff]
    %v88 = vld [vmem:[%s1 + $0x18c] sm:$0xff]
    %v89 = vld [vmem:[%s1 + $0x194] sm:$0xf]
    %v90 = vld [vmem:[%s1 + $0x198] sm:$0xff]
    %v91 = vld [vmem:[%s1 + $0x1a0] sm:$0xff]
    %v92 = vld [vmem:[%s1 + $0x1a8] sm:$0xff]
    %v93 = vld [vmem:[%s1 + $0x1b0] sm:$0xff]
    %v94 = vld [vmem:[%s1 + $0x1b8] sm:$0xff]
    %v95 = vld [vmem:[%s1 + $0x1c0] sm:$0xff]
    %v96 = vld [vmem:[%s1 + $0x1c8] sm:$0xff]
    %v97 = vld [vmem:[%s1 + $0x1d0] sm:$0xff]
    %v98 = vld [vmem:[%s1 + $0x1d8] sm:$0xf]
    %v99 = vld [vmem:[%s1 + $0x1dc] sm:$0xff]
    %v100 = vld [vmem:[%s1 + $0x1e4] sm:$0xff]
    %v101 = vld [vmem:[%s1 + $0x1ec] sm:$0xff]
    %v102 = vld [vmem:[%s1 + $0x1f4] sm:$0xff]
    %v103 = vld [vmem:[%s1 + $0x1fc] sm:$0xff]
    %v104 = vld [vmem:[%s1 + $0x204] sm:$0xff]
    %v105 = vld [vmem:[%s1 + $0x20c] sm:$0xff]
    %v106 = vld [vmem:[%s1 + $0x214] sm:$0xff]
    %v107 = vld [vmem:[%s1 + $0x21c] sm:$0xf]
    %v108 = vld [vmem:[%s1 + $0x220] sm:$0xff]
    %v109 = vld [vmem:[%s1 + $0x228] sm:$0xff]
    %v110 = vld [vmem:[%s1 + $0x230] sm:$0xff]
    %v111 = vld [vmem:[%s1 + $0x238] sm:$0xff]
    %v112 = vld [vmem:[%s1 + $0x240] sm:$0xff]
    %v113 = vld [vmem:[%s1 + $0x248] sm:$0xff]
    %v114 = vld [vmem:[%s1 + $0x250] sm:$0xff]
    %v115 = vld [vmem:[%s1 + $0x258] sm:$0xff]
    %v116 = vld [vmem:[%s1 + $0x260] sm:$0xf]
    %v117 = vld [vmem:[%s1 + $0x264] sm:$0xff]
    %v118 = vld [vmem:[%s1 + $0x26c] sm:$0xff]
    %v119 = vld [vmem:[%s1 + $0x274] sm:$0xff]
    %v120 = vld [vmem:[%s1 + $0x27c] sm:$0xff]
    %v121 = vld [vmem:[%s1 + $0x284] sm:$0xff]
    %v122 = vld [vmem:[%s1 + $0x28c] sm:$0xff]
    %v123 = vld [vmem:[%s1 + $0x294] sm:$0xff]
    %v124 = vld [vmem:[%s1 + $0x29c] sm:$0xff]
    %v125 = vld [vmem:[%s1 + $0x2a4] sm:$0xf]
    %v126 = vld [vmem:[%s1 + $0x2a8] sm:$0xff]
    %v127 = vld [vmem:[%s1 + $0x2b0] sm:$0xff]
    %v128 = vld [vmem:[%s1 + $0x2b8] sm:$0xff]
    %v129 = vld [vmem:[%s1 + $0x2c0] sm:$0xff]
    %v130 = vld [vmem:[%s1 + $0x2c8] sm:$0xff]
    %v131 = vld [vmem:[%s1 + $0x2d0] sm:$0xff]
    %v132 = vld [vmem:[%s1 + $0x2d8] sm:$0xff]
    %v133 = vld [vmem:[%s1 + $0x2e0] sm:$0xff]
    %v134 = vld [vmem:[%s1 + $0x2e8] sm:$0xf]
    %v135 = vld [vmem:[%s1 + $0x2ec] sm:$0xff]
    %v136 = vld [vmem:[%s1 + $0x2f4] sm:$0xff]
    %v137 = vld [vmem:[%s1 + $0x2fc] sm:$0xff]
    %v138 = vld [vmem:[%s1 + $0x304] sm:$0xff]
    %v139 = vld [vmem:[%s1 + $0x30c] sm:$0xff]
    %v140 = vld [vmem:[%s1 + $0x314] sm:$0xff]
    %v141 = vld [vmem:[%s1 + $0x31c] sm:$0xff]
    %v142 = vld [vmem:[%s1 + $0x324] sm:$0xff]
    %v143 = vld [vmem:[%s1 + $0x32c] sm:$0xf]
    %v144 = vld [vmem:[%s1 + $0x330] sm:$0xff]
    %v145 = vld [vmem:[%s1 + $0x338] sm:$0xff]
    %v146 = vld [vmem:[%s1 + $0x340] sm:$0xff]
    %v147 = vld [vmem:[%s1 + $0x348] sm:$0xff]
    %v148 = vld [vmem:[%s1 + $0x350] sm:$0xff]
    %v149 = vld [vmem:[%s1 + $0x358] sm:$0xff]
    %v150 = vld [vmem:[%s1 + $0x360] sm:$0xff]
    %v151 = vld [vmem:[%s1 + $0x368] sm:$0xff]
    %v152 = vld [vmem:[%s1 + $0x370] sm:$0xf]
    %v153 = vld [vmem:[%s1 + $0x374] sm:$0xff]
    %v154 = vld [vmem:[%s1 + $0x37c] sm:$0xff]
    %v155 = vld [vmem:[%s1 + $0x384] sm:$0xff]
    %v156 = vld [vmem:[%s1 + $0x38c] sm:$0xff]
    %v157 = vld [vmem:[%s1 + $0x394] sm:$0xff]
    %v158 = vld [vmem:[%s1 + $0x39c] sm:$0xff]
    %v159 = vld [vmem:[%s1 + $0x3a4] sm:$0xff]
    %v160 = vld [vmem:[%s1 + $0x3ac] sm:$0xff]
    %v161 = vld [vmem:[%s1 + $0x3b4] sm:$0xf]
    %v162 = vld [vmem:[%s1 + $0x3b8] sm:$0xff]
    %v163 = vld [vmem:[%s1 + $0x3c0] sm:$0xff]
    %v164 = vld [vmem:[%s1 + $0x3c8] sm:$0xff]
    %v165 = vld [vmem:[%s1 + $0x3d0] sm:$0xff]
    %v166 = vld [vmem:[%s1 + $0x3d8] sm:$0xff]
    %v167 = vld [vmem:[%s1 + $0x3e0] sm:$0xff]
    %v168 = vld [vmem:[%s1 + $0x3e8] sm:$0xff]
    %v169 = vld [vmem:[%s1 + $0x3f0] sm:$0xff]
    %v170 = vld [vmem:[%s1 + $0x3f8] sm:$0xf]
    %v171 = vld [vmem:[%s1 + $0x3fc] sm:$0xff]
    %v172 = vld [vmem:[%s1 + $0x404] sm:$0xff]
    %v173 = vld [vmem:[%s1 + $0x40c] sm:$0xff]
    %v174 = vld [vmem:[%s1 + $0x414] sm:$0xff]
    %v175 = vld [vmem:[%s1 + $0x41c] sm:$0xff]
    %v176 = vld [vmem:[%s1 + $0x424] sm:$0xff]
    %v177 = vld [vmem:[%s1 + $0x42c] sm:$0xff]
    %v178 = vld [vmem:[%s1 + $0x434] sm:$0xff]
    %v179 = vld [vmem:[%s1 + $0x43c] sm:$0xf]
    %v196 = vunpack.c.l.b16 %v20
    %v197 = vunpack.c.l.b16 %v21
    %v198 = vunpack.c.l.b16 %v22
    %v199 = vunpack.c.l.b16 %v23
    %v200 = vunpack.c.l.b16 %v24
    %v201 = vunpack.c.l.b16 %v25
    %v202 = vunpack.c.l.b16 %v26
    %v203 = vunpack.c.l.b16 %v27
    %v204 = vunpack.c.l.b16 %v28
    %v205 = vunpack.c.l.b16 %v29
    %v206 = vunpack.c.l.b16 %v30
    %v207 = vunpack.c.l.b16 %v31
    %v208 = vunpack.c.l.b16 %v32
    %v209 = vunpack.c.l.b16 %v33
    %v210 = vunpack.c.l.b16 %v34
    %v211 = vunpack.c.l.b16 %v35
    %v212 = vpack.c.b16 %v197, %v196
    %v213 = vpack.c.b16 %v199, %v198
    %v214 = vpack.c.b16 %v201, %v200
    %v215 = vpack.c.b16 %v203, %v202
    %v216 = vpack.c.b16 %v205, %v204
    %v217 = vpack.c.b16 %v207, %v206
    %v218 = vpack.c.b16 %v209, %v208
    %v219 = vpack.c.b16 %v211, %v210
    %v372 = vunpack.c.l.b16 %v36
    %v373 = vunpack.c.h.b16 %v36
    %v374 = vunpack.c.l.b16 %v37
    %v375 = vunpack.c.h.b16 %v37
    %v376 = vunpack.c.l.b16 %v38
    %v377 = vunpack.c.h.b16 %v38
    %v378 = vunpack.c.l.b16 %v39
    %v379 = vunpack.c.h.b16 %v39
    %v380 = vunpack.c.l.b16 %v40
    %v381 = vunpack.c.h.b16 %v40
    %v382 = vunpack.c.l.b16 %v41
    %v383 = vunpack.c.h.b16 %v41
    %v384 = vunpack.c.l.b16 %v42
    %v385 = vunpack.c.h.b16 %v42
    %v386 = vunpack.c.l.b16 %v43
    %v387 = vunpack.c.h.b16 %v43
    %v388 = vunpack.c.l.b16 %v44
    %v389 = vunpack.c.l.b16 %v45
    %v390 = vunpack.c.h.b16 %v45
    %v391 = vunpack.c.l.b16 %v46
    %v392 = vunpack.c.h.b16 %v46
    %v393 = vunpack.c.l.b16 %v47
    %v394 = vunpack.c.h.b16 %v47
    %v395 = vunpack.c.l.b16 %v48
    %v396 = vunpack.c.h.b16 %v48
    %v397 = vunpack.c.l.b16 %v49
    %v398 = vunpack.c.h.b16 %v49
    %v399 = vunpack.c.l.b16 %v50
    %v400 = vunpack.c.h.b16 %v50
    %v401 = vunpack.c.l.b16 %v51
    %v402 = vunpack.c.h.b16 %v51
    %v403 = vunpack.c.l.b16 %v52
    %v404 = vunpack.c.h.b16 %v52
    %v405 = vunpack.c.l.b16 %v53
    %v406 = vunpack.c.l.b16 %v54
    %v407 = vunpack.c.h.b16 %v54
    %v408 = vunpack.c.l.b16 %v55
    %v409 = vunpack.c.h.b16 %v55
    %v410 = vunpack.c.l.b16 %v56
    %v411 = vunpack.c.h.b16 %v56
    %v412 = vunpack.c.l.b16 %v57
    %v413 = vunpack.c.h.b16 %v57
    %v414 = vunpack.c.l.b16 %v58
    %v415 = vunpack.c.h.b16 %v58
    %v416 = vunpack.c.l.b16 %v59
    %v417 = vunpack.c.h.b16 %v59
    %v418 = vunpack.c.l.b16 %v60
    %v419 = vunpack.c.h.b16 %v60
    %v420 = vunpack.c.l.b16 %v61
    %v421 = vunpack.c.h.b16 %v61
    %v422 = vunpack.c.l.b16 %v62
    %v423 = vunpack.c.l.b16 %v63
    %v424 = vunpack.c.h.b16 %v63
    %v425 = vunpack.c.l.b16 %v64
    %v426 = vunpack.c.h.b16 %v64
    %v427 = vunpack.c.l.b16 %v65
    %v428 = vunpack.c.h.b16 %v65
    %v429 = vunpack.c.l.b16 %v66
    %v430 = vunpack.c.h.b16 %v66
    %v431 = vunpack.c.l.b16 %v67
    %v432 = vunpack.c.h.b16 %v67
    %v433 = vunpack.c.l.b16 %v68
    %v434 = vunpack.c.h.b16 %v68
    %v435 = vunpack.c.l.b16 %v69
    %v436 = vunpack.c.h.b16 %v69
    %v437 = vunpack.c.l.b16 %v70
    %v438 = vunpack.c.h.b16 %v70
    %v439 = vunpack.c.l.b16 %v71
    %v440 = vunpack.c.l.b16 %v72
    %v441 = vunpack.c.h.b16 %v72
    %v442 = vunpack.c.l.b16 %v73
    %v443 = vunpack.c.h.b16 %v73
    %v444 = vunpack.c.l.b16 %v74
    %v445 = vunpack.c.h.b16 %v74
    %v446 = vunpack.c.l.b16 %v75
    %v447 = vunpack.c.h.b16 %v75
    %v448 = vunpack.c.l.b16 %v76
    %v449 = vunpack.c.h.b16 %v76
    %v450 = vunpack.c.l.b16 %v77
    %v451 = vunpack.c.h.b16 %v77
    %v452 = vunpack.c.l.b16 %v78
    %v453 = vunpack.c.h.b16 %v78
    %v454 = vunpack.c.l.b16 %v79
    %v455 = vunpack.c.h.b16 %v79
    %v456 = vunpack.c.l.b16 %v80
    %v457 = vunpack.c.l.b16 %v81
    %v458 = vunpack.c.h.b16 %v81
    %v459 = vunpack.c.l.b16 %v82
    %v460 = vunpack.c.h.b16 %v82
    %v461 = vunpack.c.l.b16 %v83
    %v462 = vunpack.c.h.b16 %v83
    %v463 = vunpack.c.l.b16 %v84
    %v464 = vunpack.c.h.b16 %v84
    %v465 = vunpack.c.l.b16 %v85
    %v466 = vunpack.c.h.b16 %v85
    %v467 = vunpack.c.l.b16 %v86
    %v468 = vunpack.c.h.b16 %v86
    %v469 = vunpack.c.l.b16 %v87
    %v470 = vunpack.c.h.b16 %v87
    %v471 = vunpack.c.l.b16 %v88
    %v472 = vunpack.c.h.b16 %v88
    %v473 = vunpack.c.l.b16 %v89
    %v474 = vunpack.c.l.b16 %v90
    %v475 = vunpack.c.h.b16 %v90
    %v476 = vunpack.c.l.b16 %v91
    %v477 = vunpack.c.h.b16 %v91
    %v478 = vunpack.c.l.b16 %v92
    %v479 = vunpack.c.h.b16 %v92
    %v480 = vunpack.c.l.b16 %v93
    %v481 = vunpack.c.h.b16 %v93
    %v482 = vunpack.c.l.b16 %v94
    %v483 = vunpack.c.h.b16 %v94
    %v484 = vunpack.c.l.b16 %v95
    %v485 = vunpack.c.h.b16 %v95
    %v486 = vunpack.c.l.b16 %v96
    %v487 = vunpack.c.h.b16 %v96
    %v488 = vunpack.c.l.b16 %v97
    %v489 = vunpack.c.h.b16 %v97
    %v490 = vunpack.c.l.b16 %v98
    %v491 = vunpack.c.l.b16 %v99
    %v492 = vunpack.c.h.b16 %v99
    %v493 = vunpack.c.l.b16 %v100
    %v494 = vunpack.c.h.b16 %v100
    %v495 = vunpack.c.l.b16 %v101
    %v496 = vunpack.c.h.b16 %v101
    %v497 = vunpack.c.l.b16 %v102
    %v498 = vunpack.c.h.b16 %v102
    %v499 = vunpack.c.l.b16 %v103
    %v500 = vunpack.c.h.b16 %v103
    %v501 = vunpack.c.l.b16 %v104
    %v502 = vunpack.c.h.b16 %v104
    %v503 = vunpack.c.l.b16 %v105
    %v504 = vunpack.c.h.b16 %v105
    %v505 = vunpack.c.l.b16 %v106
    %v506 = vunpack.c.h.b16 %v106
    %v507 = vunpack.c.l.b16 %v107
    %v508 = vunpack.c.l.b16 %v108
    %v509 = vunpack.c.h.b16 %v108
    %v510 = vunpack.c.l.b16 %v109
    %v511 = vunpack.c.h.b16 %v109
    %v512 = vunpack.c.l.b16 %v110
    %v513 = vunpack.c.h.b16 %v110
    %v514 = vunpack.c.l.b16 %v111
    %v515 = vunpack.c.h.b16 %v111
    %v516 = vunpack.c.l.b16 %v112
    %v517 = vunpack.c.h.b16 %v112
    %v518 = vunpack.c.l.b16 %v113
    %v519 = vunpack.c.h.b16 %v113
    %v520 = vunpack.c.l.b16 %v114
    %v521 = vunpack.c.h.b16 %v114
    %v522 = vunpack.c.l.b16 %v115
    %v523 = vunpack.c.h.b16 %v115
    %v524 = vunpack.c.l.b16 %v116
    %v525 = vunpack.c.l.b16 %v117
    %v526 = vunpack.c.h.b16 %v117
    %v527 = vunpack.c.l.b16 %v118
    %v528 = vunpack.c.h.b16 %v118
    %v529 = vunpack.c.l.b16 %v119
    %v530 = vunpack.c.h.b16 %v119
    %v531 = vunpack.c.l.b16 %v120
    %v532 = vunpack.c.h.b16 %v120
    %v533 = vunpack.c.l.b16 %v121
    %v534 = vunpack.c.h.b16 %v121
    %v535 = vunpack.c.l.b16 %v122
    %v536 = vunpack.c.h.b16 %v122
    %v537 = vunpack.c.l.b16 %v123
    %v538 = vunpack.c.h.b16 %v123
    %v539 = vunpack.c.l.b16 %v124
    %v540 = vunpack.c.h.b16 %v124
    %v541 = vunpack.c.l.b16 %v125
    %v542 = vunpack.c.l.b16 %v126
    %v543 = vunpack.c.h.b16 %v126
    %v544 = vunpack.c.l.b16 %v127
    %v545 = vunpack.c.h.b16 %v127
    %v546 = vunpack.c.l.b16 %v128
    %v547 = vunpack.c.h.b16 %v128
    %v548 = vunpack.c.l.b16 %v129
    %v549 = vunpack.c.h.b16 %v129
    %v550 = vunpack.c.l.b16 %v130
    %v551 = vunpack.c.h.b16 %v130
    %v552 = vunpack.c.l.b16 %v131
    %v553 = vunpack.c.h.b16 %v131
    %v554 = vunpack.c.l.b16 %v132
    %v555 = vunpack.c.h.b16 %v132
    %v556 = vunpack.c.l.b16 %v133
    %v557 = vunpack.c.h.b16 %v133
    %v558 = vunpack.c.l.b16 %v134
    %v559 = vunpack.c.l.b16 %v135
    %v560 = vunpack.c.h.b16 %v135
    %v561 = vunpack.c.l.b16 %v136
    %v562 = vunpack.c.h.b16 %v136
    %v563 = vunpack.c.l.b16 %v137
    %v564 = vunpack.c.h.b16 %v137
    %v565 = vunpack.c.l.b16 %v138
    %v566 = vunpack.c.h.b16 %v138
    %v567 = vunpack.c.l.b16 %v139
    %v568 = vunpack.c.h.b16 %v139
    %v569 = vunpack.c.l.b16 %v140
    %v570 = vunpack.c.h.b16 %v140
    %v571 = vunpack.c.l.b16 %v141
    %v572 = vunpack.c.h.b16 %v141
    %v573 = vunpack.c.l.b16 %v142
    %v574 = vunpack.c.h.b16 %v142
    %v575 = vunpack.c.l.b16 %v143
    %v576 = vunpack.c.l.b16 %v144
    %v577 = vunpack.c.h.b16 %v144
    %v578 = vunpack.c.l.b16 %v145
    %v579 = vunpack.c.h.b16 %v145
    %v580 = vunpack.c.l.b16 %v146
    %v581 = vunpack.c.h.b16 %v146
    %v582 = vunpack.c.l.b16 %v147
    %v583 = vunpack.c.h.b16 %v147
    %v584 = vunpack.c.l.b16 %v148
    %v585 = vunpack.c.h.b16 %v148
    %v586 = vunpack.c.l.b16 %v149
    %v587 = vunpack.c.h.b16 %v149
    %v588 = vunpack.c.l.b16 %v150
    %v589 = vunpack.c.h.b16 %v150
    %v590 = vunpack.c.l.b16 %v151
    %v591 = vunpack.c.h.b16 %v151
    %v592 = vunpack.c.l.b16 %v152
    %v593 = vunpack.c.l.b16 %v153
    %v594 = vunpack.c.h.b16 %v153
    %v595 = vunpack.c.l.b16 %v154
    %v596 = vunpack.c.h.b16 %v154
    %v597 = vunpack.c.l.b16 %v155
    %v598 = vunpack.c.h.b16 %v155
    %v599 = vunpack.c.l.b16 %v156
    %v600 = vunpack.c.h.b16 %v156
    %v601 = vunpack.c.l.b16 %v157
    %v602 = vunpack.c.h.b16 %v157
    %v603 = vunpack.c.l.b16 %v158
    %v604 = vunpack.c.h.b16 %v158
    %v605 = vunpack.c.l.b16 %v159
    %v606 = vunpack.c.h.b16 %v159
    %v607 = vunpack.c.l.b16 %v160
    %v608 = vunpack.c.h.b16 %v160
    %v609 = vunpack.c.l.b16 %v161
    %v610 = vunpack.c.l.b16 %v162
    %v611 = vunpack.c.h.b16 %v162
    %v612 = vunpack.c.l.b16 %v163
    %v613 = vunpack.c.h.b16 %v163
    %v614 = vunpack.c.l.b16 %v164
    %v615 = vunpack.c.h.b16 %v164
    %v616 = vunpack.c.l.b16 %v165
    %v617 = vunpack.c.h.b16 %v165
    %v618 = vunpack.c.l.b16 %v166
    %v619 = vunpack.c.h.b16 %v166
    %v620 = vunpack.c.l.b16 %v167
    %v621 = vunpack.c.h.b16 %v167
    %v622 = vunpack.c.l.b16 %v168
    %v623 = vunpack.c.h.b16 %v168
    %v624 = vunpack.c.l.b16 %v169
    %v625 = vunpack.c.h.b16 %v169
    %v626 = vunpack.c.l.b16 %v170
    %v627 = vunpack.c.l.b16 %v171
    %v628 = vunpack.c.h.b16 %v171
    %v629 = vunpack.c.l.b16 %v172
    %v630 = vunpack.c.h.b16 %v172
    %v631 = vunpack.c.l.b16 %v173
    %v632 = vunpack.c.h.b16 %v173
    %v633 = vunpack.c.l.b16 %v174
    %v634 = vunpack.c.h.b16 %v174
    %v635 = vunpack.c.l.b16 %v175
    %v636 = vunpack.c.h.b16 %v175
    %v637 = vunpack.c.l.b16 %v176
    %v638 = vunpack.c.h.b16 %v176
    %v639 = vunpack.c.l.b16 %v177
    %v640 = vunpack.c.h.b16 %v177
    %v641 = vunpack.c.l.b16 %v178
    %v642 = vunpack.c.h.b16 %v178
    %v643 = vunpack.c.l.b16 %v179
    %v644 = vpack.c.b16 %v389, %v372
    %v645 = vpack.c.b16 %v390, %v373
    %v646 = vpack.c.b16 %v391, %v374
    %v647 = vpack.c.b16 %v392, %v375
    %v648 = vpack.c.b16 %v393, %v376
    %v649 = vpack.c.b16 %v394, %v377
    %v650 = vpack.c.b16 %v395, %v378
    %v651 = vpack.c.b16 %v396, %v379
    %v652 = vpack.c.b16 %v397, %v380
    %v653 = vpack.c.b16 %v398, %v381
    %v654 = vpack.c.b16 %v399, %v382
    %v655 = vpack.c.b16 %v400, %v383
    %v656 = vpack.c.b16 %v401, %v384
    %v657 = vpack.c.b16 %v402, %v385
    %v658 = vpack.c.b16 %v403, %v386
    %v659 = vpack.c.b16 %v404, %v387
    %v660 = vpack.c.b16 %v405, %v388
    %v661 = vpack.c.b16 %v423, %v406
    %v662 = vpack.c.b16 %v424, %v407
    %v663 = vpack.c.b16 %v425, %v408
    %v664 = vpack.c.b16 %v426, %v409
    %v665 = vpack.c.b16 %v427, %v410
    %v666 = vpack.c.b16 %v428, %v411
    %v667 = vpack.c.b16 %v429, %v412
    %v668 = vpack.c.b16 %v430, %v413
    %v669 = vpack.c.b16 %v431, %v414
    %v670 = vpack.c.b16 %v432, %v415
    %v671 = vpack.c.b16 %v433, %v416
    %v672 = vpack.c.b16 %v434, %v417
    %v673 = vpack.c.b16 %v435, %v418
    %v674 = vpack.c.b16 %v436, %v419
    %v675 = vpack.c.b16 %v437, %v420
    %v676 = vpack.c.b16 %v438, %v421
    %v677 = vpack.c.b16 %v439, %v422
    %v678 = vpack.c.b16 %v457, %v440
    %v679 = vpack.c.b16 %v458, %v441
    %v680 = vpack.c.b16 %v459, %v442
    %v681 = vpack.c.b16 %v460, %v443
    %v682 = vpack.c.b16 %v461, %v444
    %v683 = vpack.c.b16 %v462, %v445
    %v684 = vpack.c.b16 %v463, %v446
    %v685 = vpack.c.b16 %v464, %v447
    %v686 = vpack.c.b16 %v465, %v448
    %v687 = vpack.c.b16 %v466, %v449
    %v688 = vpack.c.b16 %v467, %v450
    %v689 = vpack.c.b16 %v468, %v451
    %v690 = vpack.c.b16 %v469, %v452
    %v691 = vpack.c.b16 %v470, %v453
    %v692 = vpack.c.b16 %v471, %v454
    %v693 = vpack.c.b16 %v472, %v455
    %v694 = vpack.c.b16 %v473, %v456
    %v695 = vpack.c.b16 %v491, %v474
    %v696 = vpack.c.b16 %v492, %v475
    %v697 = vpack.c.b16 %v493, %v476
    %v698 = vpack.c.b16 %v494, %v477
    %v699 = vpack.c.b16 %v495, %v478
    %v700 = vpack.c.b16 %v496, %v479
    %v701 = vpack.c.b16 %v497, %v480
    %v702 = vpack.c.b16 %v498, %v481
    %v703 = vpack.c.b16 %v499, %v482
    %v704 = vpack.c.b16 %v500, %v483
    %v705 = vpack.c.b16 %v501, %v484
    %v706 = vpack.c.b16 %v502, %v485
    %v707 = vpack.c.b16 %v503, %v486
    %v708 = vpack.c.b16 %v504, %v487
    %v709 = vpack.c.b16 %v505, %v488
    %v710 = vpack.c.b16 %v506, %v489
    %v711 = vpack.c.b16 %v507, %v490
    %v712 = vpack.c.b16 %v525, %v508
    %v713 = vpack.c.b16 %v526, %v509
    %v714 = vpack.c.b16 %v527, %v510
    %v715 = vpack.c.b16 %v528, %v511
    %v716 = vpack.c.b16 %v529, %v512
    %v717 = vpack.c.b16 %v530, %v513
    %v718 = vpack.c.b16 %v531, %v514
    %v719 = vpack.c.b16 %v532, %v515
    %v720 = vpack.c.b16 %v533, %v516
    %v721 = vpack.c.b16 %v534, %v517
    %v722 = vpack.c.b16 %v535, %v518
    %v723 = vpack.c.b16 %v536, %v519
    %v724 = vpack.c.b16 %v537, %v520
    %v725 = vpack.c.b16 %v538, %v521
    %v726 = vpack.c.b16 %v539, %v522
    %v727 = vpack.c.b16 %v540, %v523
    %v728 = vpack.c.b16 %v541, %v524
    %v729 = vpack.c.b16 %v559, %v542
    %v730 = vpack.c.b16 %v560, %v543
    %v731 = vpack.c.b16 %v561, %v544
    %v732 = vpack.c.b16 %v562, %v545
    %v733 = vpack.c.b16 %v563, %v546
    %v734 = vpack.c.b16 %v564, %v547
    %v735 = vpack.c.b16 %v565, %v548
    %v736 = vpack.c.b16 %v566, %v549
    %v737 = vpack.c.b16 %v567, %v550
    %v738 = vpack.c.b16 %v568, %v551
    %v739 = vpack.c.b16 %v569, %v552
    %v740 = vpack.c.b16 %v570, %v553
    %v741 = vpack.c.b16 %v571, %v554
    %v742 = vpack.c.b16 %v572, %v555
    %v743 = vpack.c.b16 %v573, %v556
    %v744 = vpack.c.b16 %v574, %v557
    %v745 = vpack.c.b16 %v575, %v558
    %v746 = vpack.c.b16 %v593, %v576
    %v747 = vpack.c.b16 %v594, %v577
    %v748 = vpack.c.b16 %v595, %v578
    %v749 = vpack.c.b16 %v596, %v579
    %v750 = vpack.c.b16 %v597, %v580
    %v751 = vpack.c.b16 %v598, %v581
    %v752 = vpack.c.b16 %v599, %v582
    %v753 = vpack.c.b16 %v600, %v583
    %v754 = vpack.c.b16 %v601, %v584
    %v755 = vpack.c.b16 %v602, %v585
    %v756 = vpack.c.b16 %v603, %v586
    %v757 = vpack.c.b16 %v604, %v587
    %v758 = vpack.c.b16 %v605, %v588
    %v759 = vpack.c.b16 %v606, %v589
    %v760 = vpack.c.b16 %v607, %v590
    %v761 = vpack.c.b16 %v608, %v591
    %v762 = vpack.c.b16 %v609, %v592
    %v763 = vpack.c.b16 %v627, %v610
    %v764 = vpack.c.b16 %v628, %v611
    %v765 = vpack.c.b16 %v629, %v612
    %v766 = vpack.c.b16 %v630, %v613
    %v767 = vpack.c.b16 %v631, %v614
    %v768 = vpack.c.b16 %v632, %v615
    %v769 = vpack.c.b16 %v633, %v616
    %v770 = vpack.c.b16 %v634, %v617
    %v771 = vpack.c.b16 %v635, %v618
    %v772 = vpack.c.b16 %v636, %v619
    %v773 = vpack.c.b16 %v637, %v620
    %v774 = vpack.c.b16 %v638, %v621
    %v775 = vpack.c.b16 %v639, %v622
    %v776 = vpack.c.b16 %v640, %v623
    %v777 = vpack.c.b16 %v641, %v624
    %v778 = vpack.c.b16 %v642, %v625
    %v779 = vpack.c.b16 %v643, %v626
    %916 = vmatprep.subr.bf16.mxu0 %v645
    %917 = vmatpush1.bf16.msra.mxu0 %v644
    %918 = vmatprep.subr.bf16.mxu0 %v662
    %919 = vmatpush1.bf16.msra.mxu0 %v661
    %920 = vmatprep.subr.bf16.mxu0 %v679
    %921 = vmatpush1.bf16.msra.mxu0 %v678
    %922 = vmatprep.subr.bf16.mxu0 %v696
    %923 = vmatpush1.bf16.msra.mxu0 %v695
    %924 = vmatprep.subr.bf16.mxu0 %v713
    %925 = vmatpush1.bf16.msra.mxu0 %v712
    %926 = vmatprep.subr.bf16.mxu0 %v730
    %927 = vmatpush1.bf16.msra.mxu0 %v729
    %928 = vmatprep.subr.bf16.mxu0 %v747
    %929 = vmatpush1.bf16.msra.mxu0 %v746
    %930 = vmatprep.subr.bf16.mxu0 %v764
    %931 = vmatpush1.bf16.msra.mxu0 %v763
    %932 = vmatprep.subr.bf16.mxu0 0
    %933 = vmatpush1.bf16.msra.mxu0 0
    %934 = vmatprep.subr.bf16.mxu0 0
    %935 = vmatpush1.bf16.msra.mxu0 0
    %936 = vmatprep.subr.bf16.mxu0 0
    %937 = vmatpush1.bf16.msra.mxu0 0
    %938 = vmatprep.subr.bf16.mxu0 0
    %939 = vmatpush1.bf16.msra.mxu0 0
    %940 = vmatprep.subr.bf16.mxu0 0
    %941 = vmatpush1.bf16.msra.mxu0 0
    %942 = vmatprep.subr.bf16.mxu0 0
    %943 = vmatpush1.bf16.msra.mxu0 0
    %944 = vmatprep.subr.bf16.mxu0 0
    %945 = vmatpush1.bf16.msra.mxu0 0
    %946 = vmatprep.subr.bf16.mxu0 0
    %947 = vmatpush1.bf16.msra.mxu0 0
    %948 = vmatprep.mubr.bf16.mxu0 0
    %949 = vmatmul.mubr.bf16.gmra.mrb[0].mxu0 %v212
    %v950 = vpop.f32.mrb[0].mxu0
    %v951 = vadd.f32 0.0, %v950
    %v952 = vpop.f32.mrb[0].mxu0
    %v953 = vadd.f32 0.0, %v952
    %v954 = vpop.f32.mrb[0].mxu0
    %v955 = vadd.f32 0.0, %v954
    %v956 = vpop.f32.mrb[0].mxu0
    %v957 = vadd.f32 0.0, %v956
    %958 = vmatprep.mubr.bf16.mxu0 0
    %959 = vmatmul.mubr.bf16.gmra.mrb[0].mxu0 %v213
    %v960 = vpop.f32.mrb[0].mxu0
    %v961 = vadd.f32 0.0, %v960
    %v962 = vpop.f32.mrb[0].mxu0
    %v963 = vadd.f32 0.0, %v962
    %v964 = vpop.f32.mrb[0].mxu0
    %v965 = vadd.f32 0.0, %v964
    %v966 = vpop.f32.mrb[0].mxu0
    %v967 = vadd.f32 0.0, %v966
    %968 = vmatprep.mubr.bf16.mxu0 0
    %969 = vmatmul.mubr.bf16.gmra.mrb[0].mxu0 %v214
    %v970 = vpop.f32.mrb[0].mxu0
    %v971 = vadd.f32 0.0, %v970
    %v972 = vpop.f32.mrb[0].mxu0
    %v973 = vadd.f32 0.0, %v972
    %v974 = vpop.f32.mrb[0].mxu0
    %v975 = vadd.f32 0.0, %v974
    %v976 = vpop.f32.mrb[0].mxu0
    %v977 = vadd.f32 0.0, %v976
    %978 = vmatprep.mubr.bf16.mxu0 0
    %979 = vmatmul.mubr.bf16.gmra.mrb[0].mxu0 %v215
    %v980 = vpop.f32.mrb[0].mxu0
    %v981 = vadd.f32 0.0, %v980
    %v982 = vpop.f32.mrb[0].mxu0
    %v983 = vadd.f32 0.0, %v982
    %v984 = vpop.f32.mrb[0].mxu0
    %v985 = vadd.f32 0.0, %v984
    %v986 = vpop.f32.mrb[0].mxu0
    %v987 = vadd.f32 0.0, %v986
    %988 = vmatprep.mubr.bf16.mxu0 0
    %989 = vmatmul.mubr.bf16.gmra.mrb[0].mxu0 %v216
    %v990 = vpop.f32.mrb[0].mxu0
    %v991 = vadd.f32 0.0, %v990
    %v992 = vpop.f32.mrb[0].mxu0
    %v993 = vadd.f32 0.0, %v992
    %v994 = vpop.f32.mrb[0].mxu0
    %v995 = vadd.f32 0.0, %v994
    %v996 = vpop.f32.mrb[0].mxu0
    %v997 = vadd.f32 0.0, %v996
    %998 = vmatprep.mubr.bf16.mxu0 0
    %999 = vmatmul.mubr.bf16.gmra.mrb[0].mxu0 %v217
    %v1000 = vpop.f32.mrb[0].mxu0
    %v1001 = vadd.f32 0.0, %v1000
    %v1002 = vpop.f32.mrb[0].mxu0
    %v1003 = vadd.f32 0.0, %v1002
    %v1004 = vpop.f32.mrb[0].mxu0
    %v1005 = vadd.f32 0.0, %v1004
    %v1006 = vpop.f32.mrb[0].mxu0
    %v1007 = vadd.f32 0.0, %v1006
    %1008 = vmatprep.mubr.bf16.mxu0 0
    %1009 = vmatmul.mubr.bf16.gmra.mrb[0].mxu0 %v218
    %v1010 = vpop.f32.mrb[0].mxu0
    %v1011 = vadd.f32 0.0, %v1010
    %v1012 = vpop.f32.mrb[0].mxu0
    %v1013 = vadd.f32 0.0, %v1012
    %v1014 = vpop.f32.mrb[0].mxu0
    %v1015 = vadd.f32 0.0, %v1014
    %v1016 = vpop.f32.mrb[0].mxu0
    %v1017 = vadd.f32 0.0, %v1016
    %1018 = vmatprep.mubr.bf16.mxu0 0
    %1019 = vmatmul.mubr.bf16.gmra.mrb[0].mxu0 %v219
    %v1020 = vpop.f32.mrb[0].mxu0
    %v1021 = vadd.f32 0.0, %v1020
    %v1022 = vpop.f32.mrb[0].mxu0
    %v1023 = vadd.f32 0.0, %v1022
    %v1024 = vpop.f32.mrb[0].mxu0
    %v1025 = vadd.f32 0.0, %v1024
    %v1026 = vpop.f32.mrb[0].mxu0
    %v1027 = vadd.f32 0.0, %v1026
    %1028 = vdwg.mxu0
    %1029 = vmatprep.subr.bf16.mxu0 %v647
    %1030 = vmatpush1.bf16.msra.mxu0 %v646
    %1031 = vmatprep.subr.bf16.mxu0 %v664
    %1032 = vmatpush1.bf16.msra.mxu0 %v663
    %1033 = vmatprep.subr.bf16.mxu0 %v681
    %1034 = vmatpush1.bf16.msra.mxu0 %v680
    %1035 = vmatprep.subr.bf16.mxu0 %v698
    %1036 = vmatpush1.bf16.msra.mxu0 %v697
    %1037 = vmatprep.subr.bf16.mxu0 %v715
    %1038 = vmatpush1.bf16.msra.mxu0 %v714
    %1039 = vmatprep.subr.bf16.mxu0 %v732
    %1040 = vmatpush1.bf16.msra.mxu0 %v731
    %1041 = vmatprep.subr.bf16.mxu0 %v749
    %1042 = vmatpush1.bf16.msra.mxu0 %v748
    %1043 = vmatprep.subr.bf16.mxu0 %v766
    %1044 = vmatpush1.bf16.msra.mxu0 %v765
    %1045 = vmatprep.subr.bf16.mxu0 0
    %1046 = vmatpush1.bf16.msra.mxu0 0
    %1047 = vmatprep.subr.bf16.mxu0 0
    %1048 = vmatpush1.bf16.msra.mxu0 0
    %1049 = vmatprep.subr.bf16.mxu0 0
    %1050 = vmatpush1.bf16.msra.mxu0 0
    %1051 = vmatprep.subr.bf16.mxu0 0
    %1052 = vmatpush1.bf16.msra.mxu0 0
    %1053 = vmatprep.subr.bf16.mxu0 0
    %1054 = vmatpush1.bf16.msra.mxu0 0
    %1055 = vmatprep.subr.bf16.mxu0 0
    %1056 = vmatpush1.bf16.msra.mxu0 0
    %1057 = vmatprep.subr.bf16.mxu0 0
    %1058 = vmatpush1.bf16.msra.mxu0 0
    %1059 = vmatprep.subr.bf16.mxu0 0
    %1060 = vmatpush1.bf16.msra.mxu0 0
    %1061 = vmatprep.mubr.bf16.mxu0 0
    %1062 = vmatmul.mubr.bf16.gmra.mrb[0].mxu0 %v212
    %v1063 = vpop.f32.mrb[0].mxu0
    %v1064 = vadd.f32 0.0, %v1063
    %v1065 = vpop.f32.mrb[0].mxu0
    %v1066 = vadd.f32 0.0, %v1065
    %v1067 = vpop.f32.mrb[0].mxu0
    %v1068 = vadd.f32 0.0, %v1067
    %v1069 = vpop.f32.mrb[0].mxu0
    %v1070 = vadd.f32 0.0, %v1069
    %1071 = vmatprep.mubr.bf16.mxu0 0
    %1072 = vmatmul.mubr.bf16.gmra.mrb[0].mxu0 %v213
    %v1073 = vpop.f32.mrb[0].mxu0
    %v1074 = vadd.f32 0.0, %v1073
    %v1075 = vpop.f32.mrb[0].mxu0
    %v1076 = vadd.f32 0.0, %v1075
    %v1077 = vpop.f32.mrb[0].mxu0
    %v1078 = vadd.f32 0.0, %v1077
    %v1079 = vpop.f32.mrb[0].mxu0
    %v1080 = vadd.f32 0.0, %v1079
    %1081 = vmatprep.mubr.bf16.mxu0 0
    %1082 = vmatmul.mubr.bf16.gmra.mrb[0].mxu0 %v214
    %v1083 = vpop.f32.mrb[0].mxu0
    %v1084 = vadd.f32 0.0, %v1083
    %v1085 = vpop.f32.mrb[0].mxu0
    %v1086 = vadd.f32 0.0, %v1085
    %v1087 = vpop.f32.mrb[0].mxu0
    %v1088 = vadd.f32 0.0, %v1087
    %v1089 = vpop.f32.mrb[0].mxu0
    %v1090 = vadd.f32 0.0, %v1089
    %1091 = vmatprep.mubr.bf16.mxu0 0
    %1092 = vmatmul.mubr.bf16.gmra.mrb[0].mxu0 %v215
    %v1093 = vpop.f32.mrb[0].mxu0
    %v1094 = vadd.f32 0.0, %v1093
    %v1095 = vpop.f32.mrb[0].mxu0
    %v1096 = vadd.f32 0.0, %v1095
    %v1097 = vpop.f32.mrb[0].mxu0
    %v1098 = vadd.f32 0.0, %v1097
    %v1099 = vpop.f32.mrb[0].mxu0
    %v1100 = vadd.f32 0.0, %v1099
    %1101 = vmatprep.mubr.bf16.mxu0 0
    %1102 = vmatmul.mubr.bf16.gmra.mrb[0].mxu0 %v216
    %v1103 = vpop.f32.mrb[0].mxu0
    %v1104 = vadd.f32 0.0, %v1103
    %v1105 = vpop.f32.mrb[0].mxu0
    %v1106 = vadd.f32 0.0, %v1105
    %v1107 = vpop.f32.mrb[0].mxu0
    %v1108 = vadd.f32 0.0, %v1107
    %v1109 = vpop.f32.mrb[0].mxu0
    %v1110 = vadd.f32 0.0, %v1109
    %1111 = vmatprep.mubr.bf16.mxu0 0
    %1112 = vmatmul.mubr.bf16.gmra.mrb[0].mxu0 %v217
    %v1113 = vpop.f32.mrb[0].mxu0
    %v1114 = vadd.f32 0.0, %v1113
    %v1115 = vpop.f32.mrb[0].mxu0
    %v1116 = vadd.f32 0.0, %v1115
    %v1117 = vpop.f32.mrb[0].mxu0
    %v1118 = vadd.f32 0.0, %v1117
    %v1119 = vpop.f32.mrb[0].mxu0
    %v1120 = vadd.f32 0.0, %v1119
    %1121 = vmatprep.mubr.bf16.mxu0 0
    %1122 = vmatmul.mubr.bf16.gmra.mrb[0].mxu0 %v218
    %v1123 = vpop.f32.mrb[0].mxu0
    %v1124 = vadd.f32 0.0, %v1123
    %v1125 = vpop.f32.mrb[0].mxu0
    %v1126 = vadd.f32 0.0, %v1125
    %v1127 = vpop.f32.mrb[0].mxu0
    %v1128 = vadd.f32 0.0, %v1127
    %v1129 = vpop.f32.mrb[0].mxu0
    %v1130 = vadd.f32 0.0, %v1129
    %1131 = vmatprep.mubr.bf16.mxu0 0
    %1132 = vmatmul.mubr.bf16.gmra.mrb[0].mxu0 %v219
    %v1133 = vpop.f32.mrb[0].mxu0
    %v1134 = vadd.f32 0.0, %v1133
    %v1135 = vpop.f32.mrb[0].mxu0
    %v1136 = vadd.f32 0.0, %v1135
    %v1137 = vpop.f32.mrb[0].mxu0
    %v1138 = vadd.f32 0.0, %v1137
    %v1139 = vpop.f32.mrb[0].mxu0
    %v1140 = vadd.f32 0.0, %v1139
    %1141 = vdwg.mxu0
    %1142 = vmatprep.subr.bf16.mxu0 %v649
    %1143 = vmatpush1.bf16.msra.mxu0 %v648
    %1144 = vmatprep.subr.bf16.mxu0 %v666
    %1145 = vmatpush1.bf16.msra.mxu0 %v665
    %1146 = vmatprep.subr.bf16.mxu0 %v683
    %1147 = vmatpush1.bf16.msra.mxu0 %v682
    %1148 = vmatprep.subr.bf16.mxu0 %v700
    %1149 = vmatpush1.bf16.msra.mxu0 %v699
    %1150 = vmatprep.subr.bf16.mxu0 %v717
    %1151 = vmatpush1.bf16.msra.mxu0 %v716
    %1152 = vmatprep.subr.bf16.mxu0 %v734
    %1153 = vmatpush1.bf16.msra.mxu0 %v733
    %1154 = vmatprep.subr.bf16.mxu0 %v751
    %1155 = vmatpush1.bf16.msra.mxu0 %v750
    %1156 = vmatprep.subr.bf16.mxu0 %v768
    %1157 = vmatpush1.bf16.msra.mxu0 %v767
    %1158 = vmatprep.subr.bf16.mxu0 0
    %1159 = vmatpush1.bf16.msra.mxu0 0
    %1160 = vmatprep.subr.bf16.mxu0 0
    %1161 = vmatpush1.bf16.msra.mxu0 0
    %1162 = vmatprep.subr.bf16.mxu0 0
    %1163 = vmatpush1.bf16.msra.mxu0 0
    %1164 = vmatprep.subr.bf16.mxu0 0
    %1165 = vmatpush1.bf16.msra.mxu0 0
    %1166 = vmatprep.subr.bf16.mxu0 0
    %1167 = vmatpush1.bf16.msra.mxu0 0
    %1168 = vmatprep.subr.bf16.mxu0 0
    %1169 = vmatpush1.bf16.msra.mxu0 0
    %1170 = vmatprep.subr.bf16.mxu0 0
    %1171 = vmatpush1.bf16.msra.mxu0 0
    %1172 = vmatprep.subr.bf16.mxu0 0
    %1173 = vmatpush1.bf16.msra.mxu0 0
    %1174 = vmatprep.mubr.bf16.mxu0 0
    %1175 = vmatmul.mubr.bf16.gmra.mrb[0].mxu0 %v212
    %v1176 = vpop.f32.mrb[0].mxu0
    %v1177 = vadd.f32 0.0, %v1176
    %v1178 = vpop.f32.mrb[0].mxu0
    %v1179 = vadd.f32 0.0, %v1178
    %v1180 = vpop.f32.mrb[0].mxu0
    %v1181 = vadd.f32 0.0, %v1180
    %v1182 = vpop.f32.mrb[0].mxu0
    %v1183 = vadd.f32 0.0, %v1182
    %1184 = vmatprep.mubr.bf16.mxu0 0
    %1185 = vmatmul.mubr.bf16.gmra.mrb[0].mxu0 %v213
    %v1186 = vpop.f32.mrb[0].mxu0
    %v1187 = vadd.f32 0.0, %v1186
    %v1188 = vpop.f32.mrb[0].mxu0
    %v1189 = vadd.f32 0.0, %v1188
    %v1190 = vpop.f32.mrb[0].mxu0
    %v1191 = vadd.f32 0.0, %v1190
    %v1192 = vpop.f32.mrb[0].mxu0
    %v1193 = vadd.f32 0.0, %v1192
    %1194 = vmatprep.mubr.bf16.mxu0 0
    %1195 = vmatmul.mubr.bf16.gmra.mrb[0].mxu0 %v214
    %v1196 = vpop.f32.mrb[0].mxu0
    %v1197 = vadd.f32 0.0, %v1196
    %v1198 = vpop.f32.mrb[0].mxu0
    %v1199 = vadd.f32 0.0, %v1198
    %v1200 = vpop.f32.mrb[0].mxu0
    %v1201 = vadd.f32 0.0, %v1200
    %v1202 = vpop.f32.mrb[0].mxu0
    %v1203 = vadd.f32 0.0, %v1202
    %1204 = vmatprep.mubr.bf16.mxu0 0
    %1205 = vmatmul.mubr.bf16.gmra.mrb[0].mxu0 %v215
    %v1206 = vpop.f32.mrb[0].mxu0
    %v1207 = vadd.f32 0.0, %v1206
    %v1208 = vpop.f32.mrb[0].mxu0
    %v1209 = vadd.f32 0.0, %v1208
    %v1210 = vpop.f32.mrb[0].mxu0
    %v1211 = vadd.f32 0.0, %v1210
    %v1212 = vpop.f32.mrb[0].mxu0
    %v1213 = vadd.f32 0.0, %v1212
    %1214 = vmatprep.mubr.bf16.mxu0 0
    %1215 = vmatmul.mubr.bf16.gmra.mrb[0].mxu0 %v216
    %v1216 = vpop.f32.mrb[0].mxu0
    %v1217 = vadd.f32 0.0, %v1216
    %v1218 = vpop.f32.mrb[0].mxu0
    %v1219 = vadd.f32 0.0, %v1218
    %v1220 = vpop.f32.mrb[0].mxu0
    %v1221 = vadd.f32 0.0, %v1220
    %v1222 = vpop.f32.mrb[0].mxu0
    %v1223 = vadd.f32 0.0, %v1222
    %1224 = vmatprep.mubr.bf16.mxu0 0
    %1225 = vmatmul.mubr.bf16.gmra.mrb[0].mxu0 %v217
    %v1226 = vpop.f32.mrb[0].mxu0
    %v1227 = vadd.f32 0.0, %v1226
    %v1228 = vpop.f32.mrb[0].mxu0
    %v1229 = vadd.f32 0.0, %v1228
    %v1230 = vpop.f32.mrb[0].mxu0
    %v1231 = vadd.f32 0.0, %v1230
    %v1232 = vpop.f32.mrb[0].mxu0
    %v1233 = vadd.f32 0.0, %v1232
    %1234 = vmatprep.mubr.bf16.mxu0 0
    %1235 = vmatmul.mubr.bf16.gmra.mrb[0].mxu0 %v218
    %v1236 = vpop.f32.mrb[0].mxu0
    %v1237 = vadd.f32 0.0, %v1236
    %v1238 = vpop.f32.mrb[0].mxu0
    %v1239 = vadd.f32 0.0, %v1238
    %v1240 = vpop.f32.mrb[0].mxu0
    %v1241 = vadd.f32 0.0, %v1240
    %v1242 = vpop.f32.mrb[0].mxu0
    %v1243 = vadd.f32 0.0, %v1242
    %1244 = vmatprep.mubr.bf16.mxu0 0
    %1245 = vmatmul.mubr.bf16.gmra.mrb[0].mxu0 %v219
    %v1246 = vpop.f32.mrb[0].mxu0
    %v1247 = vadd.f32 0.0, %v1246
    %v1248 = vpop.f32.mrb[0].mxu0
    %v1249 = vadd.f32 0.0, %v1248
    %v1250 = vpop.f32.mrb[0].mxu0
    %v1251 = vadd.f32 0.0, %v1250
    %v1252 = vpop.f32.mrb[0].mxu0
    %v1253 = vadd.f32 0.0, %v1252
    %1254 = vdwg.mxu0
    %1255 = vmatprep.subr.bf16.mxu0 %v651
    %1256 = vmatpush1.bf16.msra.mxu0 %v650
    %1257 = vmatprep.subr.bf16.mxu0 %v668
    %1258 = vmatpush1.bf16.msra.mxu0 %v667
    %1259 = vmatprep.subr.bf16.mxu0 %v685
    %1260 = vmatpush1.bf16.msra.mxu0 %v684
    %1261 = vmatprep.subr.bf16.mxu0 %v702
    %1262 = vmatpush1.bf16.msra.mxu0 %v701
    %1263 = vmatprep.subr.bf16.mxu0 %v719
    %1264 = vmatpush1.bf16.msra.mxu0 %v718
    %1265 = vmatprep.subr.bf16.mxu0 %v736
    %1266 = vmatpush1.bf16.msra.mxu0 %v735
    %1267 = vmatprep.subr.bf16.mxu0 %v753
    %1268 = vmatpush1.bf16.msra.mxu0 %v752
    %1269 = vmatprep.subr.bf16.mxu0 %v770
    %1270 = vmatpush1.bf16.msra.mxu0 %v769
    %1271 = vmatprep.subr.bf16.mxu0 0
    %1272 = vmatpush1.bf16.msra.mxu0 0
    %1273 = vmatprep.subr.bf16.mxu0 0
    %1274 = vmatpush1.bf16.msra.mxu0 0
    %1275 = vmatprep.subr.bf16.mxu0 0
    %1276 = vmatpush1.bf16.msra.mxu0 0
    %1277 = vmatprep.subr.bf16.mxu0 0
    %1278 = vmatpush1.bf16.msra.mxu0 0
    %1279 = vmatprep.subr.bf16.mxu0 0
    %1280 = vmatpush1.bf16.msra.mxu0 0
    %1281 = vmatprep.subr.bf16.mxu0 0
    %1282 = vmatpush1.bf16.msra.mxu0 0
    %1283 = vmatprep.subr.bf16.mxu0 0
    %1284 = vmatpush1.bf16.msra.mxu0 0
    %1285 = vmatprep.subr.bf16.mxu0 0
    %1286 = vmatpush1.bf16.msra.mxu0 0
    %1287 = vmatprep.mubr.bf16.mxu0 0
    %1288 = vmatmul.mubr.bf16.gmra.mrb[0].mxu0 %v212
    %v1289 = vpop.f32.mrb[0].mxu0
    %v1290 = vadd.f32 0.0, %v1289
    %v1291 = vpop.f32.mrb[0].mxu0
    %v1292 = vadd.f32 0.0, %v1291
    %v1293 = vpop.f32.mrb[0].mxu0
    %v1294 = vadd.f32 0.0, %v1293
    %v1295 = vpop.f32.mrb[0].mxu0
    %v1296 = vadd.f32 0.0, %v1295
    %1297 = vmatprep.mubr.bf16.mxu0 0
    %1298 = vmatmul.mubr.bf16.gmra.mrb[0].mxu0 %v213
    %v1299 = vpop.f32.mrb[0].mxu0
    %v1300 = vadd.f32 0.0, %v1299
    %v1301 = vpop.f32.mrb[0].mxu0
    %v1302 = vadd.f32 0.0, %v1301
    %v1303 = vpop.f32.mrb[0].mxu0
    %v1304 = vadd.f32 0.0, %v1303
    %v1305 = vpop.f32.mrb[0].mxu0
    %v1306 = vadd.f32 0.0, %v1305
    %1307 = vmatprep.mubr.bf16.mxu0 0
    %1308 = vmatmul.mubr.bf16.gmra.mrb[0].mxu0 %v214
    %v1309 = vpop.f32.mrb[0].mxu0
    %v1310 = vadd.f32 0.0, %v1309
    %v1311 = vpop.f32.mrb[0].mxu0
    %v1312 = vadd.f32 0.0, %v1311
    %v1313 = vpop.f32.mrb[0].mxu0
    %v1314 = vadd.f32 0.0, %v1313
    %v1315 = vpop.f32.mrb[0].mxu0
    %v1316 = vadd.f32 0.0, %v1315
    %1317 = vmatprep.mubr.bf16.mxu0 0
    %1318 = vmatmul.mubr.bf16.gmra.mrb[0].mxu0 %v215
    %v1319 = vpop.f32.mrb[0].mxu0
    %v1320 = vadd.f32 0.0, %v1319
    %v1321 = vpop.f32.mrb[0].mxu0
    %v1322 = vadd.f32 0.0, %v1321
    %v1323 = vpop.f32.mrb[0].mxu0
    %v1324 = vadd.f32 0.0, %v1323
    %v1325 = vpop.f32.mrb[0].mxu0
    %v1326 = vadd.f32 0.0, %v1325
    %1327 = vmatprep.mubr.bf16.mxu0 0
    %1328 = vmatmul.mubr.bf16.gmra.mrb[0].mxu0 %v216
    %v1329 = vpop.f32.mrb[0].mxu0
    %v1330 = vadd.f32 0.0, %v1329
    %v1331 = vpop.f32.mrb[0].mxu0
    %v1332 = vadd.f32 0.0, %v1331
    %v1333 = vpop.f32.mrb[0].mxu0
    %v1334 = vadd.f32 0.0, %v1333
    %v1335 = vpop.f32.mrb[0].mxu0
    %v1336 = vadd.f32 0.0, %v1335
    %1337 = vmatprep.mubr.bf16.mxu0 0
    %1338 = vmatmul.mubr.bf16.gmra.mrb[0].mxu0 %v217
    %v1339 = vpop.f32.mrb[0].mxu0
    %v1340 = vadd.f32 0.0, %v1339
    %v1341 = vpop.f32.mrb[0].mxu0
    %v1342 = vadd.f32 0.0, %v1341
    %v1343 = vpop.f32.mrb[0].mxu0
    %v1344 = vadd.f32 0.0, %v1343
    %v1345 = vpop.f32.mrb[0].mxu0
    %v1346 = vadd.f32 0.0, %v1345
    %1347 = vmatprep.mubr.bf16.mxu0 0
    %1348 = vmatmul.mubr.bf16.gmra.mrb[0].mxu0 %v218
    %v1349 = vpop.f32.mrb[0].mxu0
    %v1350 = vadd.f32 0.0, %v1349
    %v1351 = vpop.f32.mrb[0].mxu0
    %v1352 = vadd.f32 0.0, %v1351
    %v1353 = vpop.f32.mrb[0].mxu0
    %v1354 = vadd.f32 0.0, %v1353
    %v1355 = vpop.f32.mrb[0].mxu0
    %v1356 = vadd.f32 0.0, %v1355
    %1357 = vmatprep.mubr.bf16.mxu0 0
    %1358 = vmatmul.mubr.bf16.gmra.mrb[0].mxu0 %v219
    %v1359 = vpop.f32.mrb[0].mxu0
    %v1360 = vadd.f32 0.0, %v1359
    %v1361 = vpop.f32.mrb[0].mxu0
    %v1362 = vadd.f32 0.0, %v1361
    %v1363 = vpop.f32.mrb[0].mxu0
    %v1364 = vadd.f32 0.0, %v1363
    %v1365 = vpop.f32.mrb[0].mxu0
    %v1366 = vadd.f32 0.0, %v1365
    %1367 = vdwg.mxu0
    %1368 = vmatprep.subr.bf16.mxu0 %v653
    %1369 = vmatpush1.bf16.msra.mxu0 %v652
    %1370 = vmatprep.subr.bf16.mxu0 %v670
    %1371 = vmatpush1.bf16.msra.mxu0 %v669
    %1372 = vmatprep.subr.bf16.mxu0 %v687
    %1373 = vmatpush1.bf16.msra.mxu0 %v686
    %1374 = vmatprep.subr.bf16.mxu0 %v704
    %1375 = vmatpush1.bf16.msra.mxu0 %v703
    %1376 = vmatprep.subr.bf16.mxu0 %v721
    %1377 = vmatpush1.bf16.msra.mxu0 %v720
    %1378 = vmatprep.subr.bf16.mxu0 %v738
    %1379 = vmatpush1.bf16.msra.mxu0 %v737
    %1380 = vmatprep.subr.bf16.mxu0 %v755
    %1381 = vmatpush1.bf16.msra.mxu0 %v754
    %1382 = vmatprep.subr.bf16.mxu0 %v772
    %1383 = vmatpush1.bf16.msra.mxu0 %v771
    %1384 = vmatprep.subr.bf16.mxu0 0
    %1385 = vmatpush1.bf16.msra.mxu0 0
    %1386 = vmatprep.subr.bf16.mxu0 0
    %1387 = vmatpush1.bf16.msra.mxu0 0
    %1388 = vmatprep.subr.bf16.mxu0 0
    %1389 = vmatpush1.bf16.msra.mxu0 0
    %1390 = vmatprep.subr.bf16.mxu0 0
    %1391 = vmatpush1.bf16.msra.mxu0 0
    %1392 = vmatprep.subr.bf16.mxu0 0
    %1393 = vmatpush1.bf16.msra.mxu0 0
    %1394 = vmatprep.subr.bf16.mxu0 0
    %1395 = vmatpush1.bf16.msra.mxu0 0
    %1396 = vmatprep.subr.bf16.mxu0 0
    %1397 = vmatpush1.bf16.msra.mxu0 0
    %1398 = vmatprep.subr.bf16.mxu0 0
    %1399 = vmatpush1.bf16.msra.mxu0 0
    %1400 = vmatprep.mubr.bf16.mxu0 0
    %1401 = vmatmul.mubr.bf16.gmra.mrb[0].mxu0 %v212
    %v1402 = vpop.f32.mrb[0].mxu0
    %v1403 = vadd.f32 0.0, %v1402
    %v1404 = vpop.f32.mrb[0].mxu0
    %v1405 = vadd.f32 0.0, %v1404
    %v1406 = vpop.f32.mrb[0].mxu0
    %v1407 = vadd.f32 0.0, %v1406
    %v1408 = vpop.f32.mrb[0].mxu0
    %v1409 = vadd.f32 0.0, %v1408
    %1410 = vmatprep.mubr.bf16.mxu0 0
    %1411 = vmatmul.mubr.bf16.gmra.mrb[0].mxu0 %v213
    %v1412 = vpop.f32.mrb[0].mxu0
    %v1413 = vadd.f32 0.0, %v1412
    %v1414 = vpop.f32.mrb[0].mxu0
    %v1415 = vadd.f32 0.0, %v1414
    %v1416 = vpop.f32.mrb[0].mxu0
    %v1417 = vadd.f32 0.0, %v1416
    %v1418 = vpop.f32.mrb[0].mxu0
    %v1419 = vadd.f32 0.0, %v1418
    %1420 = vmatprep.mubr.bf16.mxu0 0
    %1421 = vmatmul.mubr.bf16.gmra.mrb[0].mxu0 %v214
    %v1422 = vpop.f32.mrb[0].mxu0
    %v1423 = vadd.f32 0.0, %v1422
    %v1424 = vpop.f32.mrb[0].mxu0
    %v1425 = vadd.f32 0.0, %v1424
    %v1426 = vpop.f32.mrb[0].mxu0
    %v1427 = vadd.f32 0.0, %v1426
    %v1428 = vpop.f32.mrb[0].mxu0
    %v1429 = vadd.f32 0.0, %v1428
    %1430 = vmatprep.mubr.bf16.mxu0 0
    %1431 = vmatmul.mubr.bf16.gmra.mrb[0].mxu0 %v215
    %v1432 = vpop.f32.mrb[0].mxu0
    %v1433 = vadd.f32 0.0, %v1432
    %v1434 = vpop.f32.mrb[0].mxu0
    %v1435 = vadd.f32 0.0, %v1434
    %v1436 = vpop.f32.mrb[0].mxu0
    %v1437 = vadd.f32 0.0, %v1436
    %v1438 = vpop.f32.mrb[0].mxu0
    %v1439 = vadd.f32 0.0, %v1438
    %1440 = vmatprep.mubr.bf16.mxu0 0
    %1441 = vmatmul.mubr.bf16.gmra.mrb[0].mxu0 %v216
    %v1442 = vpop.f32.mrb[0].mxu0
    %v1443 = vadd.f32 0.0, %v1442
    %v1444 = vpop.f32.mrb[0].mxu0
    %v1445 = vadd.f32 0.0, %v1444
    %v1446 = vpop.f32.mrb[0].mxu0
    %v1447 = vadd.f32 0.0, %v1446
    %v1448 = vpop.f32.mrb[0].mxu0
    %v1449 = vadd.f32 0.0, %v1448
    %1450 = vmatprep.mubr.bf16.mxu0 0
    %1451 = vmatmul.mubr.bf16.gmra.mrb[0].mxu0 %v217
    %v1452 = vpop.f32.mrb[0].mxu0
    %v1453 = vadd.f32 0.0, %v1452
    %v1454 = vpop.f32.mrb[0].mxu0
    %v1455 = vadd.f32 0.0, %v1454
    %v1456 = vpop.f32.mrb[0].mxu0
    %v1457 = vadd.f32 0.0, %v1456
    %v1458 = vpop.f32.mrb[0].mxu0
    %v1459 = vadd.f32 0.0, %v1458
    %1460 = vmatprep.mubr.bf16.mxu0 0
    %1461 = vmatmul.mubr.bf16.gmra.mrb[0].mxu0 %v218
    %v1462 = vpop.f32.mrb[0].mxu0
    %v1463 = vadd.f32 0.0, %v1462
    %v1464 = vpop.f32.mrb[0].mxu0
    %v1465 = vadd.f32 0.0, %v1464
    %v1466 = vpop.f32.mrb[0].mxu0
    %v1467 = vadd.f32 0.0, %v1466
    %v1468 = vpop.f32.mrb[0].mxu0
    %v1469 = vadd.f32 0.0, %v1468
    %1470 = vmatprep.mubr.bf16.mxu0 0
    %1471 = vmatmul.mubr.bf16.gmra.mrb[0].mxu0 %v219
    %v1472 = vpop.f32.mrb[0].mxu0
    %v1473 = vadd.f32 0.0, %v1472
    %v1474 = vpop.f32.mrb[0].mxu0
    %v1475 = vadd.f32 0.0, %v1474
    %v1476 = vpop.f32.mrb[0].mxu0
    %v1477 = vadd.f32 0.0, %v1476
    %v1478 = vpop.f32.mrb[0].mxu0
    %v1479 = vadd.f32 0.0, %v1478
    %1480 = vdwg.mxu0
    %1481 = vmatprep.subr.bf16.mxu0 %v655
    %1482 = vmatpush1.bf16.msra.mxu0 %v654
    %1483 = vmatprep.subr.bf16.mxu0 %v672
    %1484 = vmatpush1.bf16.msra.mxu0 %v671
    %1485 = vmatprep.subr.bf16.mxu0 %v689
    %1486 = vmatpush1.bf16.msra.mxu0 %v688
    %1487 = vmatprep.subr.bf16.mxu0 %v706
    %1488 = vmatpush1.bf16.msra.mxu0 %v705
    %1489 = vmatprep.subr.bf16.mxu0 %v723
    %1490 = vmatpush1.bf16.msra.mxu0 %v722
    %1491 = vmatprep.subr.bf16.mxu0 %v740
    %1492 = vmatpush1.bf16.msra.mxu0 %v739
    %1493 = vmatprep.subr.bf16.mxu0 %v757
    %1494 = vmatpush1.bf16.msra.mxu0 %v756
    %1495 = vmatprep.subr.bf16.mxu0 %v774
    %1496 = vmatpush1.bf16.msra.mxu0 %v773
    %1497 = vmatprep.subr.bf16.mxu0 0
    %1498 = vmatpush1.bf16.msra.mxu0 0
    %1499 = vmatprep.subr.bf16.mxu0 0
    %1500 = vmatpush1.bf16.msra.mxu0 0
    %1501 = vmatprep.subr.bf16.mxu0 0
    %1502 = vmatpush1.bf16.msra.mxu0 0
    %1503 = vmatprep.subr.bf16.mxu0 0
    %1504 = vmatpush1.bf16.msra.mxu0 0
    %1505 = vmatprep.subr.bf16.mxu0 0
    %1506 = vmatpush1.bf16.msra.mxu0 0
    %1507 = vmatprep.subr.bf16.mxu0 0
    %1508 = vmatpush1.bf16.msra.mxu0 0
    %1509 = vmatprep.subr.bf16.mxu0 0
    %1510 = vmatpush1.bf16.msra.mxu0 0
    %1511 = vmatprep.subr.bf16.mxu0 0
    %1512 = vmatpush1.bf16.msra.mxu0 0
    %1513 = vmatprep.mubr.bf16.mxu0 0
    %1514 = vmatmul.mubr.bf16.gmra.mrb[0].mxu0 %v212
    %v1515 = vpop.f32.mrb[0].mxu0
    %v1516 = vadd.f32 0.0, %v1515
    %v1517 = vpop.f32.mrb[0].mxu0
    %v1518 = vadd.f32 0.0, %v1517
    %v1519 = vpop.f32.mrb[0].mxu0
    %v1520 = vadd.f32 0.0, %v1519
    %v1521 = vpop.f32.mrb[0].mxu0
    %v1522 = vadd.f32 0.0, %v1521
    %1523 = vmatprep.mubr.bf16.mxu0 0
    %1524 = vmatmul.mubr.bf16.gmra.mrb[0].mxu0 %v213
    %v1525 = vpop.f32.mrb[0].mxu0
    %v1526 = vadd.f32 0.0, %v1525
    %v1527 = vpop.f32.mrb[0].mxu0
    %v1528 = vadd.f32 0.0, %v1527
    %v1529 = vpop.f32.mrb[0].mxu0
    %v1530 = vadd.f32 0.0, %v1529
    %v1531 = vpop.f32.mrb[0].mxu0
    %v1532 = vadd.f32 0.0, %v1531
    %1533 = vmatprep.mubr.bf16.mxu0 0
    %1534 = vmatmul.mubr.bf16.gmra.mrb[0].mxu0 %v214
    %v1535 = vpop.f32.mrb[0].mxu0
    %v1536 = vadd.f32 0.0, %v1535
    %v1537 = vpop.f32.mrb[0].mxu0
    %v1538 = vadd.f32 0.0, %v1537
    %v1539 = vpop.f32.mrb[0].mxu0
    %v1540 = vadd.f32 0.0, %v1539
    %v1541 = vpop.f32.mrb[0].mxu0
    %v1542 = vadd.f32 0.0, %v1541
    %1543 = vmatprep.mubr.bf16.mxu0 0
    %1544 = vmatmul.mubr.bf16.gmra.mrb[0].mxu0 %v215
    %v1545 = vpop.f32.mrb[0].mxu0
    %v1546 = vadd.f32 0.0, %v1545
    %v1547 = vpop.f32.mrb[0].mxu0
    %v1548 = vadd.f32 0.0, %v1547
    %v1549 = vpop.f32.mrb[0].mxu0
    %v1550 = vadd.f32 0.0, %v1549
    %v1551 = vpop.f32.mrb[0].mxu0
    %v1552 = vadd.f32 0.0, %v1551
    %1553 = vmatprep.mubr.bf16.mxu0 0
    %1554 = vmatmul.mubr.bf16.gmra.mrb[0].mxu0 %v216
    %v1555 = vpop.f32.mrb[0].mxu0
    %v1556 = vadd.f32 0.0, %v1555
    %v1557 = vpop.f32.mrb[0].mxu0
    %v1558 = vadd.f32 0.0, %v1557
    %v1559 = vpop.f32.mrb[0].mxu0
    %v1560 = vadd.f32 0.0, %v1559
    %v1561 = vpop.f32.mrb[0].mxu0
    %v1562 = vadd.f32 0.0, %v1561
    %1563 = vmatprep.mubr.bf16.mxu0 0
    %1564 = vmatmul.mubr.bf16.gmra.mrb[0].mxu0 %v217
    %v1565 = vpop.f32.mrb[0].mxu0
    %v1566 = vadd.f32 0.0, %v1565
    %v1567 = vpop.f32.mrb[0].mxu0
    %v1568 = vadd.f32 0.0, %v1567
    %v1569 = vpop.f32.mrb[0].mxu0
    %v1570 = vadd.f32 0.0, %v1569
    %v1571 = vpop.f32.mrb[0].mxu0
    %v1572 = vadd.f32 0.0, %v1571
    %1573 = vmatprep.mubr.bf16.mxu0 0
    %1574 = vmatmul.mubr.bf16.gmra.mrb[0].mxu0 %v218
    %v1575 = vpop.f32.mrb[0].mxu0
    %v1576 = vadd.f32 0.0, %v1575
    %v1577 = vpop.f32.mrb[0].mxu0
    %v1578 = vadd.f32 0.0, %v1577
    %v1579 = vpop.f32.mrb[0].mxu0
    %v1580 = vadd.f32 0.0, %v1579
    %v1581 = vpop.f32.mrb[0].mxu0
    %v1582 = vadd.f32 0.0, %v1581
    %1583 = vmatprep.mubr.bf16.mxu0 0
    %1584 = vmatmul.mubr.bf16.gmra.mrb[0].mxu0 %v219
    %v1585 = vpop.f32.mrb[0].mxu0
    %v1586 = vadd.f32 0.0, %v1585
    %v1587 = vpop.f32.mrb[0].mxu0
    %v1588 = vadd.f32 0.0, %v1587
    %v1589 = vpop.f32.mrb[0].mxu0
    %v1590 = vadd.f32 0.0, %v1589
    %v1591 = vpop.f32.mrb[0].mxu0
    %v1592 = vadd.f32 0.0, %v1591
    %1593 = vdwg.mxu0
    %1594 = vmatprep.subr.bf16.mxu0 %v657
    %1595 = vmatpush1.bf16.msra.mxu0 %v656
    %1596 = vmatprep.subr.bf16.mxu0 %v674
    %1597 = vmatpush1.bf16.msra.mxu0 %v673
    %1598 = vmatprep.subr.bf16.mxu0 %v691
    %1599 = vmatpush1.bf16.msra.mxu0 %v690
    %1600 = vmatprep.subr.bf16.mxu0 %v708
    %1601 = vmatpush1.bf16.msra.mxu0 %v707
    %1602 = vmatprep.subr.bf16.mxu0 %v725
    %1603 = vmatpush1.bf16.msra.mxu0 %v724
    %1604 = vmatprep.subr.bf16.mxu0 %v742
    %1605 = vmatpush1.bf16.msra.mxu0 %v741
    %1606 = vmatprep.subr.bf16.mxu0 %v759
    %1607 = vmatpush1.bf16.msra.mxu0 %v758
    %1608 = vmatprep.subr.bf16.mxu0 %v776
    %1609 = vmatpush1.bf16.msra.mxu0 %v775
    %1610 = vmatprep.subr.bf16.mxu0 0
    %1611 = vmatpush1.bf16.msra.mxu0 0
    %1612 = vmatprep.subr.bf16.mxu0 0
    %1613 = vmatpush1.bf16.msra.mxu0 0
    %1614 = vmatprep.subr.bf16.mxu0 0
    %1615 = vmatpush1.bf16.msra.mxu0 0
    %1616 = vmatprep.subr.bf16.mxu0 0
    %1617 = vmatpush1.bf16.msra.mxu0 0
    %1618 = vmatprep.subr.bf16.mxu0 0
    %1619 = vmatpush1.bf16.msra.mxu0 0
    %1620 = vmatprep.subr.bf16.mxu0 0
    %1621 = vmatpush1.bf16.msra.mxu0 0
    %1622 = vmatprep.subr.bf16.mxu0 0
    %1623 = vmatpush1.bf16.msra.mxu0 0
    %1624 = vmatprep.subr.bf16.mxu0 0
    %1625 = vmatpush1.bf16.msra.mxu0 0
    %1626 = vmatprep.mubr.bf16.mxu0 0
    %1627 = vmatmul.mubr.bf16.gmra.mrb[0].mxu0 %v212
    %v1628 = vpop.f32.mrb[0].mxu0
    %v1629 = vadd.f32 0.0, %v1628
    %v1630 = vpop.f32.mrb[0].mxu0
    %v1631 = vadd.f32 0.0, %v1630
    %v1632 = vpop.f32.mrb[0].mxu0
    %v1633 = vadd.f32 0.0, %v1632
    %v1634 = vpop.f32.mrb[0].mxu0
    %v1635 = vadd.f32 0.0, %v1634
    %1636 = vmatprep.mubr.bf16.mxu0 0
    %1637 = vmatmul.mubr.bf16.gmra.mrb[0].mxu0 %v213
    %v1638 = vpop.f32.mrb[0].mxu0
    %v1639 = vadd.f32 0.0, %v1638
    %v1640 = vpop.f32.mrb[0].mxu0
    %v1641 = vadd.f32 0.0, %v1640
    %v1642 = vpop.f32.mrb[0].mxu0
    %v1643 = vadd.f32 0.0, %v1642
    %v1644 = vpop.f32.mrb[0].mxu0
    %v1645 = vadd.f32 0.0, %v1644
    %1646 = vmatprep.mubr.bf16.mxu0 0
    %1647 = vmatmul.mubr.bf16.gmra.mrb[0].mxu0 %v214
    %v1648 = vpop.f32.mrb[0].mxu0
    %v1649 = vadd.f32 0.0, %v1648
    %v1650 = vpop.f32.mrb[0].mxu0
    %v1651 = vadd.f32 0.0, %v1650
    %v1652 = vpop.f32.mrb[0].mxu0
    %v1653 = vadd.f32 0.0, %v1652
    %v1654 = vpop.f32.mrb[0].mxu0
    %v1655 = vadd.f32 0.0, %v1654
    %1656 = vmatprep.mubr.bf16.mxu0 0
    %1657 = vmatmul.mubr.bf16.gmra.mrb[0].mxu0 %v215
    %v1658 = vpop.f32.mrb[0].mxu0
    %v1659 = vadd.f32 0.0, %v1658
    %v1660 = vpop.f32.mrb[0].mxu0
    %v1661 = vadd.f32 0.0, %v1660
    %v1662 = vpop.f32.mrb[0].mxu0
    %v1663 = vadd.f32 0.0, %v1662
    %v1664 = vpop.f32.mrb[0].mxu0
    %v1665 = vadd.f32 0.0, %v1664
    %1666 = vmatprep.mubr.bf16.mxu0 0
    %1667 = vmatmul.mubr.bf16.gmra.mrb[0].mxu0 %v216
    %v1668 = vpop.f32.mrb[0].mxu0
    %v1669 = vadd.f32 0.0, %v1668
    %v1670 = vpop.f32.mrb[0].mxu0
    %v1671 = vadd.f32 0.0, %v1670
    %v1672 = vpop.f32.mrb[0].mxu0
    %v1673 = vadd.f32 0.0, %v1672
    %v1674 = vpop.f32.mrb[0].mxu0
    %v1675 = vadd.f32 0.0, %v1674
    %1676 = vmatprep.mubr.bf16.mxu0 0
    %1677 = vmatmul.mubr.bf16.gmra.mrb[0].mxu0 %v217
    %v1678 = vpop.f32.mrb[0].mxu0
    %v1679 = vadd.f32 0.0, %v1678
    %v1680 = vpop.f32.mrb[0].mxu0
    %v1681 = vadd.f32 0.0, %v1680
    %v1682 = vpop.f32.mrb[0].mxu0
    %v1683 = vadd.f32 0.0, %v1682
    %v1684 = vpop.f32.mrb[0].mxu0
    %v1685 = vadd.f32 0.0, %v1684
    %1686 = vmatprep.mubr.bf16.mxu0 0
    %1687 = vmatmul.mubr.bf16.gmra.mrb[0].mxu0 %v218
    %v1688 = vpop.f32.mrb[0].mxu0
    %v1689 = vadd.f32 0.0, %v1688
    %v1690 = vpop.f32.mrb[0].mxu0
    %v1691 = vadd.f32 0.0, %v1690
    %v1692 = vpop.f32.mrb[0].mxu0
    %v1693 = vadd.f32 0.0, %v1692
    %v1694 = vpop.f32.mrb[0].mxu0
    %v1695 = vadd.f32 0.0, %v1694
    %1696 = vmatprep.mubr.bf16.mxu0 0
    %1697 = vmatmul.mubr.bf16.gmra.mrb[0].mxu0 %v219
    %v1698 = vpop.f32.mrb[0].mxu0
    %v1699 = vadd.f32 0.0, %v1698
    %v1700 = vpop.f32.mrb[0].mxu0
    %v1701 = vadd.f32 0.0, %v1700
    %v1702 = vpop.f32.mrb[0].mxu0
    %v1703 = vadd.f32 0.0, %v1702
    %v1704 = vpop.f32.mrb[0].mxu0
    %v1705 = vadd.f32 0.0, %v1704
    %1706 = vdwg.mxu0
    %1707 = vmatprep.subr.bf16.mxu0 %v659
    %1708 = vmatpush1.bf16.msra.mxu0 %v658
    %1709 = vmatprep.subr.bf16.mxu0 %v676
    %1710 = vmatpush1.bf16.msra.mxu0 %v675
    %1711 = vmatprep.subr.bf16.mxu0 %v693
    %1712 = vmatpush1.bf16.msra.mxu0 %v692
    %1713 = vmatprep.subr.bf16.mxu0 %v710
    %1714 = vmatpush1.bf16.msra.mxu0 %v709
    %1715 = vmatprep.subr.bf16.mxu0 %v727
    %1716 = vmatpush1.bf16.msra.mxu0 %v726
    %1717 = vmatprep.subr.bf16.mxu0 %v744
    %1718 = vmatpush1.bf16.msra.mxu0 %v743
    %1719 = vmatprep.subr.bf16.mxu0 %v761
    %1720 = vmatpush1.bf16.msra.mxu0 %v760
    %1721 = vmatprep.subr.bf16.mxu0 %v778
    %1722 = vmatpush1.bf16.msra.mxu0 %v777
    %1723 = vmatprep.subr.bf16.mxu0 0
    %1724 = vmatpush1.bf16.msra.mxu0 0
    %1725 = vmatprep.subr.bf16.mxu0 0
    %1726 = vmatpush1.bf16.msra.mxu0 0
    %1727 = vmatprep.subr.bf16.mxu0 0
    %1728 = vmatpush1.bf16.msra.mxu0 0
    %1729 = vmatprep.subr.bf16.mxu0 0
    %1730 = vmatpush1.bf16.msra.mxu0 0
    %1731 = vmatprep.subr.bf16.mxu0 0
    %1732 = vmatpush1.bf16.msra.mxu0 0
    %1733 = vmatprep.subr.bf16.mxu0 0
    %1734 = vmatpush1.bf16.msra.mxu0 0
    %1735 = vmatprep.subr.bf16.mxu0 0
    %1736 = vmatpush1.bf16.msra.mxu0 0
    %1737 = vmatprep.subr.bf16.mxu0 0
    %1738 = vmatpush1.bf16.msra.mxu0 0
    %1739 = vmatprep.mubr.bf16.mxu0 0
    %1740 = vmatmul.mubr.bf16.gmra.mrb[0].mxu0 %v212
    %v1741 = vpop.f32.mrb[0].mxu0
    %v1742 = vadd.f32 0.0, %v1741
    %v1743 = vpop.f32.mrb[0].mxu0
    %v1744 = vadd.f32 0.0, %v1743
    %v1745 = vpop.f32.mrb[0].mxu0
    %v1746 = vadd.f32 0.0, %v1745
    %v1747 = vpop.f32.mrb[0].mxu0
    %v1748 = vadd.f32 0.0, %v1747
    %1749 = vmatprep.mubr.bf16.mxu0 0
    %1750 = vmatmul.mubr.bf16.gmra.mrb[0].mxu0 %v213
    %v1751 = vpop.f32.mrb[0].mxu0
    %v1752 = vadd.f32 0.0, %v1751
    %v1753 = vpop.f32.mrb[0].mxu0
    %v1754 = vadd.f32 0.0, %v1753
    %v1755 = vpop.f32.mrb[0].mxu0
    %v1756 = vadd.f32 0.0, %v1755
    %v1757 = vpop.f32.mrb[0].mxu0
    %v1758 = vadd.f32 0.0, %v1757
    %1759 = vmatprep.mubr.bf16.mxu0 0
    %1760 = vmatmul.mubr.bf16.gmra.mrb[0].mxu0 %v214
    %v1761 = vpop.f32.mrb[0].mxu0
    %v1762 = vadd.f32 0.0, %v1761
    %v1763 = vpop.f32.mrb[0].mxu0
    %v1764 = vadd.f32 0.0, %v1763
    %v1765 = vpop.f32.mrb[0].mxu0
    %v1766 = vadd.f32 0.0, %v1765
    %v1767 = vpop.f32.mrb[0].mxu0
    %v1768 = vadd.f32 0.0, %v1767
    %1769 = vmatprep.mubr.bf16.mxu0 0
    %1770 = vmatmul.mubr.bf16.gmra.mrb[0].mxu0 %v215
    %v1771 = vpop.f32.mrb[0].mxu0
    %v1772 = vadd.f32 0.0, %v1771
    %v1773 = vpop.f32.mrb[0].mxu0
    %v1774 = vadd.f32 0.0, %v1773
    %v1775 = vpop.f32.mrb[0].mxu0
    %v1776 = vadd.f32 0.0, %v1775
    %v1777 = vpop.f32.mrb[0].mxu0
    %v1778 = vadd.f32 0.0, %v1777
    %1779 = vmatprep.mubr.bf16.mxu0 0
    %1780 = vmatmul.mubr.bf16.gmra.mrb[0].mxu0 %v216
    %v1781 = vpop.f32.mrb[0].mxu0
    %v1782 = vadd.f32 0.0, %v1781
    %v1783 = vpop.f32.mrb[0].mxu0
    %v1784 = vadd.f32 0.0, %v1783
    %v1785 = vpop.f32.mrb[0].mxu0
    %v1786 = vadd.f32 0.0, %v1785
    %v1787 = vpop.f32.mrb[0].mxu0
    %v1788 = vadd.f32 0.0, %v1787
    %1789 = vmatprep.mubr.bf16.mxu0 0
    %1790 = vmatmul.mubr.bf16.gmra.mrb[0].mxu0 %v217
    %v1791 = vpop.f32.mrb[0].mxu0
    %v1792 = vadd.f32 0.0, %v1791
    %v1793 = vpop.f32.mrb[0].mxu0
    %v1794 = vadd.f32 0.0, %v1793
    %v1795 = vpop.f32.mrb[0].mxu0
    %v1796 = vadd.f32 0.0, %v1795
    %v1797 = vpop.f32.mrb[0].mxu0
    %v1798 = vadd.f32 0.0, %v1797
    %1799 = vmatprep.mubr.bf16.mxu0 0
    %1800 = vmatmul.mubr.bf16.gmra.mrb[0].mxu0 %v218
    %v1801 = vpop.f32.mrb[0].mxu0
    %v1802 = vadd.f32 0.0, %v1801
    %v1803 = vpop.f32.mrb[0].mxu0
    %v1804 = vadd.f32 0.0, %v1803
    %v1805 = vpop.f32.mrb[0].mxu0
    %v1806 = vadd.f32 0.0, %v1805
    %v1807 = vpop.f32.mrb[0].mxu0
    %v1808 = vadd.f32 0.0, %v1807
    %1809 = vmatprep.mubr.bf16.mxu0 0
    %1810 = vmatmul.mubr.bf16.gmra.mrb[0].mxu0 %v219
    %v1811 = vpop.f32.mrb[0].mxu0
    %v1812 = vadd.f32 0.0, %v1811
    %v1813 = vpop.f32.mrb[0].mxu0
    %v1814 = vadd.f32 0.0, %v1813
    %v1815 = vpop.f32.mrb[0].mxu0
    %v1816 = vadd.f32 0.0, %v1815
    %v1817 = vpop.f32.mrb[0].mxu0
    %v1818 = vadd.f32 0.0, %v1817
    %1819 = vdwg.mxu0
    %1820 = vmatprep.subr.bf16.mxu0 0
    %1821 = vmatpush1.bf16.msra.mxu0 %v660
    %1822 = vmatprep.subr.bf16.mxu0 0
    %1823 = vmatpush1.bf16.msra.mxu0 %v677
    %1824 = vmatprep.subr.bf16.mxu0 0
    %1825 = vmatpush1.bf16.msra.mxu0 %v694
    %1826 = vmatprep.subr.bf16.mxu0 0
    %1827 = vmatpush1.bf16.msra.mxu0 %v711
    %1828 = vmatprep.subr.bf16.mxu0 0
    %1829 = vmatpush1.bf16.msra.mxu0 %v728
    %1830 = vmatprep.subr.bf16.mxu0 0
    %1831 = vmatpush1.bf16.msra.mxu0 %v745
    %1832 = vmatprep.subr.bf16.mxu0 0
    %1833 = vmatpush1.bf16.msra.mxu0 %v762
    %1834 = vmatprep.subr.bf16.mxu0 0
    %1835 = vmatpush1.bf16.msra.mxu0 %v779
    %1836 = vmatprep.subr.bf16.mxu0 0
    %1837 = vmatpush1.bf16.msra.mxu0 0
    %1838 = vmatprep.subr.bf16.mxu0 0
    %1839 = vmatpush1.bf16.msra.mxu0 0
    %1840 = vmatprep.subr.bf16.mxu0 0
    %1841 = vmatpush1.bf16.msra.mxu0 0
    %1842 = vmatprep.subr.bf16.mxu0 0
    %1843 = vmatpush1.bf16.msra.mxu0 0
    %1844 = vmatprep.subr.bf16.mxu0 0
    %1845 = vmatpush1.bf16.msra.mxu0 0
    %1846 = vmatprep.subr.bf16.mxu0 0
    %1847 = vmatpush1.bf16.msra.mxu0 0
    %1848 = vmatprep.subr.bf16.mxu0 0
    %1849 = vmatpush1.bf16.msra.mxu0 0
    %1850 = vmatprep.subr.bf16.mxu0 0
    %1851 = vmatpush1.bf16.msra.mxu0 0
    %1852 = vmatprep.mubr.bf16.mxu0 0
    %1853 = vmatmul.mubr.bf16.gmra.mrb[0].mxu0 %v212
    %v1854 = vpop.f32.mrb[0].mxu0
    %v1855 = vadd.f32 0.0, %v1854
    %v1856 = vpop.f32.mrb[0].mxu0
    %v1857 = vpop.f32.mrb[0].mxu0
    %v1858 = vadd.f32 0.0, %v1857
    %v1859 = vpop.f32.mrb[0].mxu0
    %1860 = vmatprep.mubr.bf16.mxu0 0
    %1861 = vmatmul.mubr.bf16.gmra.mrb[0].mxu0 %v213
    %v1862 = vpop.f32.mrb[0].mxu0
    %v1863 = vadd.f32 0.0, %v1862
    %v1864 = vpop.f32.mrb[0].mxu0
    %v1865 = vpop.f32.mrb[0].mxu0
    %v1866 = vadd.f32 0.0, %v1865
    %v1867 = vpop.f32.mrb[0].mxu0
    %1868 = vmatprep.mubr.bf16.mxu0 0
    %1869 = vmatmul.mubr.bf16.gmra.mrb[0].mxu0 %v214
    %v1870 = vpop.f32.mrb[0].mxu0
    %v1871 = vadd.f32 0.0, %v1870
    %v1872 = vpop.f32.mrb[0].mxu0
    %v1873 = vpop.f32.mrb[0].mxu0
    %v1874 = vadd.f32 0.0, %v1873
    %v1875 = vpop.f32.mrb[0].mxu0
    %1876 = vmatprep.mubr.bf16.mxu0 0
    %1877 = vmatmul.mubr.bf16.gmra.mrb[0].mxu0 %v215
    %v1878 = vpop.f32.mrb[0].mxu0
    %v1879 = vadd.f32 0.0, %v1878
    %v1880 = vpop.f32.mrb[0].mxu0
    %v1881 = vpop.f32.mrb[0].mxu0
    %v1882 = vadd.f32 0.0, %v1881
    %v1883 = vpop.f32.mrb[0].mxu0
    %1884 = vmatprep.mubr.bf16.mxu0 0
    %1885 = vmatmul.mubr.bf16.gmra.mrb[0].mxu0 %v216
    %v1886 = vpop.f32.mrb[0].mxu0
    %v1887 = vadd.f32 0.0, %v1886
    %v1888 = vpop.f32.mrb[0].mxu0
    %v1889 = vpop.f32.mrb[0].mxu0
    %v1890 = vadd.f32 0.0, %v1889
    %v1891 = vpop.f32.mrb[0].mxu0
    %1892 = vmatprep.mubr.bf16.mxu0 0
    %1893 = vmatmul.mubr.bf16.gmra.mrb[0].mxu0 %v217
    %v1894 = vpop.f32.mrb[0].mxu0
    %v1895 = vadd.f32 0.0, %v1894
    %v1896 = vpop.f32.mrb[0].mxu0
    %v1897 = vpop.f32.mrb[0].mxu0
    %v1898 = vadd.f32 0.0, %v1897
    %v1899 = vpop.f32.mrb[0].mxu0
    %1900 = vmatprep.mubr.bf16.mxu0 0
    %1901 = vmatmul.mubr.bf16.gmra.mrb[0].mxu0 %v218
    %v1902 = vpop.f32.mrb[0].mxu0
    %v1903 = vadd.f32 0.0, %v1902
    %v1904 = vpop.f32.mrb[0].mxu0
    %v1905 = vpop.f32.mrb[0].mxu0
    %v1906 = vadd.f32 0.0, %v1905
    %v1907 = vpop.f32.mrb[0].mxu0
    %1908 = vmatprep.mubr.bf16.mxu0 0
    %1909 = vmatmul.mubr.bf16.gmra.mrb[0].mxu0 %v219
    %v1910 = vpop.f32.mrb[0].mxu0
    %v1911 = vadd.f32 0.0, %v1910
    %v1912 = vpop.f32.mrb[0].mxu0
    %v1913 = vpop.f32.mrb[0].mxu0
    %v1914 = vadd.f32 0.0, %v1913
    %v1915 = vpop.f32.mrb[0].mxu0
    %1916 = vdwg.mxu0
    %v1917 = vpack.c.bf16 %v955, %v951
    %v1918 = vpack.c.bf16 %v957, %v953
    %v1919 = vpack.c.bf16 %v1068, %v1064
    %v1920 = vpack.c.bf16 %v1070, %v1066
    %v1921 = vpack.c.bf16 %v1181, %v1177
    %v1922 = vpack.c.bf16 %v1183, %v1179
    %v1923 = vpack.c.bf16 %v1294, %v1290
    %v1924 = vpack.c.bf16 %v1296, %v1292
    %v1925 = vpack.c.bf16 %v965, %v961
    %v1926 = vpack.c.bf16 %v967, %v963
    %v1927 = vpack.c.bf16 %v1078, %v1074
    %v1928 = vpack.c.bf16 %v1080, %v1076
    %v1929 = vpack.c.bf16 %v1191, %v1187
    %v1930 = vpack.c.bf16 %v1193, %v1189
    %v1931 = vpack.c.bf16 %v1304, %v1300
    %v1932 = vpack.c.bf16 %v1306, %v1302
    %v1933 = vpack.c.bf16 %v975, %v971
    %v1934 = vpack.c.bf16 %v977, %v973
    %v1935 = vpack.c.bf16 %v1088, %v1084
    %v1936 = vpack.c.bf16 %v1090, %v1086
    %v1937 = vpack.c.bf16 %v1201, %v1197
    %v1938 = vpack.c.bf16 %v1203, %v1199
    %v1939 = vpack.c.bf16 %v1314, %v1310
    %v1940 = vpack.c.bf16 %v1316, %v1312
    %v1941 = vpack.c.bf16 %v985, %v981
    %v1942 = vpack.c.bf16 %v987, %v983
    %v1943 = vpack.c.bf16 %v1098, %v1094
    %v1944 = vpack.c.bf16 %v1100, %v1096
    %v1945 = vpack.c.bf16 %v1211, %v1207
    %v1946 = vpack.c.bf16 %v1213, %v1209
    %v1947 = vpack.c.bf16 %v1324, %v1320
    %v1948 = vpack.c.bf16 %v1326, %v1322
    %v1949 = vpack.c.bf16 %v995, %v991
    %v1950 = vpack.c.bf16 %v997, %v993
    %v1951 = vpack.c.bf16 %v1108, %v1104
    %v1952 = vpack.c.bf16 %v1110, %v1106
    %v1953 = vpack.c.bf16 %v1221, %v1217
    %v1954 = vpack.c.bf16 %v1223, %v1219
    %v1955 = vpack.c.bf16 %v1334, %v1330
    %v1956 = vpack.c.bf16 %v1336, %v1332
    %v1957 = vpack.c.bf16 %v1005, %v1001
    %v1958 = vpack.c.bf16 %v1007, %v1003
    %v1959 = vpack.c.bf16 %v1118, %v1114
    %v1960 = vpack.c.bf16 %v1120, %v1116
    %v1961 = vpack.c.bf16 %v1231, %v1227
    %v1962 = vpack.c.bf16 %v1233, %v1229
    %v1963 = vpack.c.bf16 %v1344, %v1340
    %v1964 = vpack.c.bf16 %v1346, %v1342
    %v1965 = vpack.c.bf16 %v1015, %v1011
    %v1966 = vpack.c.bf16 %v1017, %v1013
    %v1967 = vpack.c.bf16 %v1128, %v1124
    %v1968 = vpack.c.bf16 %v1130, %v1126
    %v1969 = vpack.c.bf16 %v1241, %v1237
    %v1970 = vpack.c.bf16 %v1243, %v1239
    %v1971 = vpack.c.bf16 %v1354, %v1350
    %v1972 = vpack.c.bf16 %v1356, %v1352
    %v1973 = vpack.c.bf16 %v1025, %v1021
    %v1974 = vpack.c.bf16 %v1027, %v1023
    %v1975 = vpack.c.bf16 %v1138, %v1134
    %v1976 = vpack.c.bf16 %v1140, %v1136
    %v1977 = vpack.c.bf16 %v1251, %v1247
    %v1978 = vpack.c.bf16 %v1253, %v1249
    %v1979 = vpack.c.bf16 %v1364, %v1360
    %v1980 = vpack.c.bf16 %v1366, %v1362
    %v2045 = vunpack.c.l.b16 %v1917
    %v2046 = vunpack.c.l.b16 %v1918
    %v2047 = vunpack.c.l.b16 %v1919
    %v2048 = vunpack.c.l.b16 %v1920
    %v2049 = vunpack.c.l.b16 %v1921
    %v2050 = vunpack.c.l.b16 %v1922
    %v2051 = vunpack.c.l.b16 %v1923
    %v2052 = vunpack.c.l.b16 %v1924
    %v2053 = vunpack.c.h.b16 %v1917
    %v2054 = vunpack.c.h.b16 %v1918
    %v2055 = vunpack.c.h.b16 %v1919
    %v2056 = vunpack.c.h.b16 %v1920
    %v2057 = vunpack.c.h.b16 %v1921
    %v2058 = vunpack.c.h.b16 %v1922
    %v2059 = vunpack.c.h.b16 %v1923
    %v2060 = vunpack.c.h.b16 %v1924
    %v2061 = vunpack.c.l.b16 %v1925
    %v2062 = vunpack.c.l.b16 %v1926
    %v2063 = vunpack.c.l.b16 %v1927
    %v2064 = vunpack.c.l.b16 %v1928
    %v2065 = vunpack.c.l.b16 %v1929
    %v2066 = vunpack.c.l.b16 %v1930
    %v2067 = vunpack.c.l.b16 %v1931
    %v2068 = vunpack.c.l.b16 %v1932
    %v2069 = vunpack.c.h.b16 %v1925
    %v2070 = vunpack.c.h.b16 %v1926
    %v2071 = vunpack.c.h.b16 %v1927
    %v2072 = vunpack.c.h.b16 %v1928
    %v2073 = vunpack.c.h.b16 %v1929
    %v2074 = vunpack.c.h.b16 %v1930
    %v2075 = vunpack.c.h.b16 %v1931
    %v2076 = vunpack.c.h.b16 %v1932
    %v2077 = vunpack.c.l.b16 %v1933
    %v2078 = vunpack.c.l.b16 %v1934
    %v2079 = vunpack.c.l.b16 %v1935
    %v2080 = vunpack.c.l.b16 %v1936
    %v2081 = vunpack.c.l.b16 %v1937
    %v2082 = vunpack.c.l.b16 %v1938
    %v2083 = vunpack.c.l.b16 %v1939
    %v2084 = vunpack.c.l.b16 %v1940
    %v2085 = vunpack.c.h.b16 %v1933
    %v2086 = vunpack.c.h.b16 %v1934
    %v2087 = vunpack.c.h.b16 %v1935
    %v2088 = vunpack.c.h.b16 %v1936
    %v2089 = vunpack.c.h.b16 %v1937
    %v2090 = vunpack.c.h.b16 %v1938
    %v2091 = vunpack.c.h.b16 %v1939
    %v2092 = vunpack.c.h.b16 %v1940
    %v2093 = vunpack.c.l.b16 %v1941
    %v2094 = vunpack.c.l.b16 %v1942
    %v2095 = vunpack.c.l.b16 %v1943
    %v2096 = vunpack.c.l.b16 %v1944
    %v2097 = vunpack.c.l.b16 %v1945
    %v2098 = vunpack.c.l.b16 %v1946
    %v2099 = vunpack.c.l.b16 %v1947
    %v2100 = vunpack.c.l.b16 %v1948
    %v2101 = vunpack.c.h.b16 %v1941
    %v2102 = vunpack.c.h.b16 %v1942
    %v2103 = vunpack.c.h.b16 %v1943
    %v2104 = vunpack.c.h.b16 %v1944
    %v2105 = vunpack.c.h.b16 %v1945
    %v2106 = vunpack.c.h.b16 %v1946
    %v2107 = vunpack.c.h.b16 %v1947
    %v2108 = vunpack.c.h.b16 %v1948
    %v2109 = vunpack.c.l.b16 %v1949
    %v2110 = vunpack.c.l.b16 %v1950
    %v2111 = vunpack.c.l.b16 %v1951
    %v2112 = vunpack.c.l.b16 %v1952
    %v2113 = vunpack.c.l.b16 %v1953
    %v2114 = vunpack.c.l.b16 %v1954
    %v2115 = vunpack.c.l.b16 %v1955
    %v2116 = vunpack.c.l.b16 %v1956
    %v2117 = vunpack.c.h.b16 %v1949
    %v2118 = vunpack.c.h.b16 %v1950
    %v2119 = vunpack.c.h.b16 %v1951
    %v2120 = vunpack.c.h.b16 %v1952
    %v2121 = vunpack.c.h.b16 %v1953
    %v2122 = vunpack.c.h.b16 %v1954
    %v2123 = vunpack.c.h.b16 %v1955
    %v2124 = vunpack.c.h.b16 %v1956
    %v2125 = vunpack.c.l.b16 %v1957
    %v2126 = vunpack.c.l.b16 %v1958
    %v2127 = vunpack.c.l.b16 %v1959
    %v2128 = vunpack.c.l.b16 %v1960
    %v2129 = vunpack.c.l.b16 %v1961
    %v2130 = vunpack.c.l.b16 %v1962
    %v2131 = vunpack.c.l.b16 %v1963
    %v2132 = vunpack.c.l.b16 %v1964
    %v2133 = vunpack.c.h.b16 %v1957
    %v2134 = vunpack.c.h.b16 %v1958
    %v2135 = vunpack.c.h.b16 %v1959
    %v2136 = vunpack.c.h.b16 %v1960
    %v2137 = vunpack.c.h.b16 %v1961
    %v2138 = vunpack.c.h.b16 %v1962
    %v2139 = vunpack.c.h.b16 %v1963
    %v2140 = vunpack.c.h.b16 %v1964
    %v2141 = vunpack.c.l.b16 %v1965
    %v2142 = vunpack.c.l.b16 %v1966
    %v2143 = vunpack.c.l.b16 %v1967
    %v2144 = vunpack.c.l.b16 %v1968
    %v2145 = vunpack.c.l.b16 %v1969
    %v2146 = vunpack.c.l.b16 %v1970
    %v2147 = vunpack.c.l.b16 %v1971
    %v2148 = vunpack.c.l.b16 %v1972
    %v2149 = vunpack.c.h.b16 %v1965
    %v2150 = vunpack.c.h.b16 %v1966
    %v2151 = vunpack.c.h.b16 %v1967
    %v2152 = vunpack.c.h.b16 %v1968
    %v2153 = vunpack.c.h.b16 %v1969
    %v2154 = vunpack.c.h.b16 %v1970
    %v2155 = vunpack.c.h.b16 %v1971
    %v2156 = vunpack.c.h.b16 %v1972
    %v2157 = vunpack.c.l.b16 %v1973
    %v2158 = vunpack.c.l.b16 %v1974
    %v2159 = vunpack.c.l.b16 %v1975
    %v2160 = vunpack.c.l.b16 %v1976
    %v2161 = vunpack.c.l.b16 %v1977
    %v2162 = vunpack.c.l.b16 %v1978
    %v2163 = vunpack.c.l.b16 %v1979
    %v2164 = vunpack.c.l.b16 %v1980
    %v2165 = vunpack.c.h.b16 %v1973
    %v2166 = vunpack.c.h.b16 %v1974
    %v2167 = vunpack.c.h.b16 %v1975
    %v2168 = vunpack.c.h.b16 %v1976
    %v2169 = vunpack.c.h.b16 %v1977
    %v2170 = vunpack.c.h.b16 %v1978
    %v2171 = vunpack.c.h.b16 %v1979
    %v2172 = vunpack.c.h.b16 %v1980
    %v2173 = vpack.c.b16 %v2046, %v2045
    %v2174 = vpack.c.b16 %v2048, %v2047
    %v2175 = vpack.c.b16 %v2050, %v2049
    %v2176 = vpack.c.b16 %v2052, %v2051
    %v2177 = vpack.c.b16 %v2054, %v2053
    %v2178 = vpack.c.b16 %v2056, %v2055
    %v2179 = vpack.c.b16 %v2058, %v2057
    %v2180 = vpack.c.b16 %v2060, %v2059
    %v2181 = vpack.c.b16 %v2062, %v2061
    %v2182 = vpack.c.b16 %v2064, %v2063
    %v2183 = vpack.c.b16 %v2066, %v2065
    %v2184 = vpack.c.b16 %v2068, %v2067
    %v2185 = vpack.c.b16 %v2070, %v2069
    %v2186 = vpack.c.b16 %v2072, %v2071
    %v2187 = vpack.c.b16 %v2074, %v2073
    %v2188 = vpack.c.b16 %v2076, %v2075
    %v2189 = vpack.c.b16 %v2078, %v2077
    %v2190 = vpack.c.b16 %v2080, %v2079
    %v2191 = vpack.c.b16 %v2082, %v2081
    %v2192 = vpack.c.b16 %v2084, %v2083
    %v2193 = vpack.c.b16 %v2086, %v2085
    %v2194 = vpack.c.b16 %v2088, %v2087
    %v2195 = vpack.c.b16 %v2090, %v2089
    %v2196 = vpack.c.b16 %v2092, %v2091
    %v2197 = vpack.c.b16 %v2094, %v2093
    %v2198 = vpack.c.b16 %v2096, %v2095
    %v2199 = vpack.c.b16 %v2098, %v2097
    %v2200 = vpack.c.b16 %v2100, %v2099
    %v2201 = vpack.c.b16 %v2102, %v2101
    %v2202 = vpack.c.b16 %v2104, %v2103
    %v2203 = vpack.c.b16 %v2106, %v2105
    %v2204 = vpack.c.b16 %v2108, %v2107
    %v2205 = vpack.c.b16 %v2110, %v2109
    %v2206 = vpack.c.b16 %v2112, %v2111
    %v2207 = vpack.c.b16 %v2114, %v2113
    %v2208 = vpack.c.b16 %v2116, %v2115
    %v2209 = vpack.c.b16 %v2118, %v2117
    %v2210 = vpack.c.b16 %v2120, %v2119
    %v2211 = vpack.c.b16 %v2122, %v2121
    %v2212 = vpack.c.b16 %v2124, %v2123
    %v2213 = vpack.c.b16 %v2126, %v2125
    %v2214 = vpack.c.b16 %v2128, %v2127
    %v2215 = vpack.c.b16 %v2130, %v2129
    %v2216 = vpack.c.b16 %v2132, %v2131
    %v2217 = vpack.c.b16 %v2134, %v2133
    %v2218 = vpack.c.b16 %v2136, %v2135
    %v2219 = vpack.c.b16 %v2138, %v2137
    %v2220 = vpack.c.b16 %v2140, %v2139
    %v2221 = vpack.c.b16 %v2142, %v2141
    %v2222 = vpack.c.b16 %v2144, %v2143
    %v2223 = vpack.c.b16 %v2146, %v2145
    %v2224 = vpack.c.b16 %v2148, %v2147
    %v2225 = vpack.c.b16 %v2150, %v2149
    %v2226 = vpack.c.b16 %v2152, %v2151
    %v2227 = vpack.c.b16 %v2154, %v2153
    %v2228 = vpack.c.b16 %v2156, %v2155
    %v2229 = vpack.c.b16 %v2158, %v2157
    %v2230 = vpack.c.b16 %v2160, %v2159
    %v2231 = vpack.c.b16 %v2162, %v2161
    %v2232 = vpack.c.b16 %v2164, %v2163
    %v2233 = vpack.c.b16 %v2166, %v2165
    %v2234 = vpack.c.b16 %v2168, %v2167
    %v2235 = vpack.c.b16 %v2170, %v2169
    %v2236 = vpack.c.b16 %v2172, %v2171
    %2301 = vst [vmem:[#allocation2] sm:$0xff] %v2173
    %2302 = vst [vmem:[#allocation2 + $0x8] sm:$0xff] %v2174
    %2303 = vst [vmem:[#allocation2 + $0x10] sm:$0xff] %v2175
    %2304 = vst [vmem:[#allocation2 + $0x18] sm:$0xff] %v2176
    %2305 = vst [vmem:[#allocation2 + $0x20] sm:$0xff] %v2177
    %2306 = vst [vmem:[#allocation2 + $0x28] sm:$0xff] %v2178
    %2307 = vst [vmem:[#allocation2 + $0x30] sm:$0xff] %v2179
    %2308 = vst [vmem:[#allocation2 + $0x38] sm:$0xff] %v2180
    %2309 = vst [vmem:[#allocation2 + $0x40] sm:$0xff] %v2181
    %2310 = vst [vmem:[#allocation2 + $0x48] sm:$0xff] %v2182
    %2311 = vst [vmem:[#allocation2 + $0x50] sm:$0xff] %v2183
    %2312 = vst [vmem:[#allocation2 + $0x58] sm:$0xff] %v2184
    %2313 = vst [vmem:[#allocation2 + $0x60] sm:$0xff] %v2185
    %2314 = vst [vmem:[#allocation2 + $0x68] sm:$0xff] %v2186
    %2315 = vst [vmem:[#allocation2 + $0x70] sm:$0xff] %v2187
    %2316 = vst [vmem:[#allocation2 + $0x78] sm:$0xff] %v2188
    %2317 = vst [vmem:[#allocation2 + $0x80] sm:$0xff] %v2189
    %2318 = vst [vmem:[#allocation2 + $0x88] sm:$0xff] %v2190
    %2319 = vst [vmem:[#allocation2 + $0x90] sm:$0xff] %v2191
    %2320 = vst [vmem:[#allocation2 + $0x98] sm:$0xff] %v2192
    %2321 = vst [vmem:[#allocation2 + $0xa0] sm:$0xff] %v2193
    %2322 = vst [vmem:[#allocation2 + $0xa8] sm:$0xff] %v2194
    %2323 = vst [vmem:[#allocation2 + $0xb0] sm:$0xff] %v2195
    %2324 = vst [vmem:[#allocation2 + $0xb8] sm:$0xff] %v2196
    %2325 = vst [vmem:[#allocation2 + $0xc0] sm:$0xff] %v2197
    %2326 = vst [vmem:[#allocation2 + $0xc8] sm:$0xff] %v2198
    %2327 = vst [vmem:[#allocation2 + $0xd0] sm:$0xff] %v2199
    %2328 = vst [vmem:[#allocation2 + $0xd8] sm:$0xff] %v2200
    %2329 = vst [vmem:[#allocation2 + $0xe0] sm:$0xff] %v2201
    %2330 = vst [vmem:[#allocation2 + $0xe8] sm:$0xff] %v2202
    %2331 = vst [vmem:[#allocation2 + $0xf0] sm:$0xff] %v2203
    %2332 = vst [vmem:[#allocation2 + $0xf8] sm:$0xff] %v2204
    %2333 = vst [vmem:[#allocation2 + $0x100] sm:$0xff] %v2205
    %2334 = vst [vmem:[#allocation2 + $0x108] sm:$0xff] %v2206
    %2335 = vst [vmem:[#allocation2 + $0x110] sm:$0xff] %v2207
    %2336 = vst [vmem:[#allocation2 + $0x118] sm:$0xff] %v2208
    %2337 = vst [vmem:[#allocation2 + $0x120] sm:$0xff] %v2209
    %2338 = vst [vmem:[#allocation2 + $0x128] sm:$0xff] %v2210
    %2339 = vst [vmem:[#allocation2 + $0x130] sm:$0xff] %v2211
    %2340 = vst [vmem:[#allocation2 + $0x138] sm:$0xff] %v2212
    %2341 = vst [vmem:[#allocation2 + $0x140] sm:$0xff] %v2213
    %2342 = vst [vmem:[#allocation2 + $0x148] sm:$0xff] %v2214
    %2343 = vst [vmem:[#allocation2 + $0x150] sm:$0xff] %v2215
    %2344 = vst [vmem:[#allocation2 + $0x158] sm:$0xff] %v2216
    %2345 = vst [vmem:[#allocation2 + $0x160] sm:$0xff] %v2217
    %2346 = vst [vmem:[#allocation2 + $0x168] sm:$0xff] %v2218
    %2347 = vst [vmem:[#allocation2 + $0x170] sm:$0xff] %v2219
    %2348 = vst [vmem:[#allocation2 + $0x178] sm:$0xff] %v2220
    %2349 = vst [vmem:[#allocation2 + $0x180] sm:$0xff] %v2221
    %2350 = vst [vmem:[#allocation2 + $0x188] sm:$0xff] %v2222
    %2351 = vst [vmem:[#allocation2 + $0x190] sm:$0xff] %v2223
    %2352 = vst [vmem:[#allocation2 + $0x198] sm:$0xff] %v2224
    %2353 = vst [vmem:[#allocation2 + $0x1a0] sm:$0xff] %v2225
    %2354 = vst [vmem:[#allocation2 + $0x1a8] sm:$0xff] %v2226
    %2355 = vst [vmem:[#allocation2 + $0x1b0] sm:$0xff] %v2227
    %2356 = vst [vmem:[#allocation2 + $0x1b8] sm:$0xff] %v2228
    %2357 = vst [vmem:[#allocation2 + $0x1c0] sm:$0xff] %v2229
    %2358 = vst [vmem:[#allocation2 + $0x1c8] sm:$0xff] %v2230
    %2359 = vst [vmem:[#allocation2 + $0x1d0] sm:$0xff] %v2231
    %2360 = vst [vmem:[#allocation2 + $0x1d8] sm:$0xff] %v2232
    %2361 = vst [vmem:[#allocation2 + $0x1e0] sm:$0xff] %v2233
    %2362 = vst [vmem:[#allocation2 + $0x1e8] sm:$0xff] %v2234
    %2363 = vst [vmem:[#allocation2 + $0x1f0] sm:$0xff] %v2235
    %2364 = vst [vmem:[#allocation2 + $0x1f8] sm:$0xff] %v2236
    %v2365 = vld [vmem:[%s2] sm:$0xff]
    %v2367 = vlaneseq
    %v2368 = vshrl.u32 %v2367, 7
    %v2369 = vsub.s32 0, %v2368
    %v2370 = vrot.slane %v2365, %v2369
    %v2371 = vlaneseq
    %v2372 = vshrl.u32 %v2371, 7
    %v2373 = vsub.s32 1, %v2372
    %v2374 = vrot.slane %v2365, %v2373
    %v2375 = vlaneseq
    %v2376 = vshrl.u32 %v2375, 7
    %v2377 = vsub.s32 2, %v2376
    %v2378 = vrot.slane %v2365, %v2377
    %v2379 = vlaneseq
    %v2380 = vshrl.u32 %v2379, 7
    %v2381 = vsub.s32 3, %v2380
    %v2382 = vrot.slane %v2365, %v2381
    %v2383 = vlaneseq
    %v2384 = vshrl.u32 %v2383, 7
    %v2385 = vsub.s32 4, %v2384
    %v2386 = vrot.slane %v2365, %v2385
    %v2387 = vlaneseq
    %v2388 = vshrl.u32 %v2387, 7
    %v2389 = vsub.s32 5, %v2388
    %v2390 = vrot.slane %v2365, %v2389
    %v2391 = vlaneseq
    %v2392 = vshrl.u32 %v2391, 7
    %v2393 = vsub.s32 6, %v2392
    %v2394 = vrot.slane %v2365, %v2393
    %v2395 = vlaneseq
    %v2396 = vshrl.u32 %v2395, 7
    %v2397 = vsub.s32 7, %v2396
    %v2398 = vrot.slane %v2365, %v2397
    %v2407 = vadd.f32 %v1403, %v2370
    %v2408 = vadd.f32 %v1405, %v2374
    %v2409 = vadd.f32 %v1516, %v2378
    %v2410 = vadd.f32 %v1518, %v2382
    %v2411 = vadd.f32 %v1629, %v2386
    %v2412 = vadd.f32 %v1631, %v2390
    %v2413 = vadd.f32 %v1742, %v2394
    %v2414 = vadd.f32 %v1744, %v2398
    %v2415 = vadd.f32 %v1407, %v2370
    %v2416 = vadd.f32 %v1409, %v2374
    %v2417 = vadd.f32 %v1520, %v2378
    %v2418 = vadd.f32 %v1522, %v2382
    %v2419 = vadd.f32 %v1633, %v2386
    %v2420 = vadd.f32 %v1635, %v2390
    %v2421 = vadd.f32 %v1746, %v2394
    %v2422 = vadd.f32 %v1748, %v2398
    %v2423 = vadd.f32 %v1413, %v2370
    %v2424 = vadd.f32 %v1415, %v2374
    %v2425 = vadd.f32 %v1526, %v2378
    %v2426 = vadd.f32 %v1528, %v2382
    %v2427 = vadd.f32 %v1639, %v2386
    %v2428 = vadd.f32 %v1641, %v2390
    %v2429 = vadd.f32 %v1752, %v2394
    %v2430 = vadd.f32 %v1754, %v2398
    %v2431 = vadd.f32 %v1417, %v2370
    %v2432 = vadd.f32 %v1419, %v2374
    %v2433 = vadd.f32 %v1530, %v2378
    %v2434 = vadd.f32 %v1532, %v2382
    %v2435 = vadd.f32 %v1643, %v2386
    %v2436 = vadd.f32 %v1645, %v2390
    %v2437 = vadd.f32 %v1756, %v2394
    %v2438 = vadd.f32 %v1758, %v2398
    %v2439 = vadd.f32 %v1423, %v2370
    %v2440 = vadd.f32 %v1425, %v2374
    %v2441 = vadd.f32 %v1536, %v2378
    %v2442 = vadd.f32 %v1538, %v2382
    %v2443 = vadd.f32 %v1649, %v2386
    %v2444 = vadd.f32 %v1651, %v2390
    %v2445 = vadd.f32 %v1762, %v2394
    %v2446 = vadd.f32 %v1764, %v2398
    %v2447 = vadd.f32 %v1427, %v2370
    %v2448 = vadd.f32 %v1429, %v2374
    %v2449 = vadd.f32 %v1540, %v2378
    %v2450 = vadd.f32 %v1542, %v2382
    %v2451 = vadd.f32 %v1653, %v2386
    %v2452 = vadd.f32 %v1655, %v2390
    %v2453 = vadd.f32 %v1766, %v2394
    %v2454 = vadd.f32 %v1768, %v2398
    %v2455 = vadd.f32 %v1433, %v2370
    %v2456 = vadd.f32 %v1435, %v2374
    %v2457 = vadd.f32 %v1546, %v2378
    %v2458 = vadd.f32 %v1548, %v2382
    %v2459 = vadd.f32 %v1659, %v2386
    %v2460 = vadd.f32 %v1661, %v2390
    %v2461 = vadd.f32 %v1772, %v2394
    %v2462 = vadd.f32 %v1774, %v2398
    %v2463 = vadd.f32 %v1437, %v2370
    %v2464 = vadd.f32 %v1439, %v2374
    %v2465 = vadd.f32 %v1550, %v2378
    %v2466 = vadd.f32 %v1552, %v2382
    %v2467 = vadd.f32 %v1663, %v2386
    %v2468 = vadd.f32 %v1665, %v2390
    %v2469 = vadd.f32 %v1776, %v2394
    %v2470 = vadd.f32 %v1778, %v2398
    %v2471 = vadd.f32 %v1443, %v2370
    %v2472 = vadd.f32 %v1445, %v2374
    %v2473 = vadd.f32 %v1556, %v2378
    %v2474 = vadd.f32 %v1558, %v2382
    %v2475 = vadd.f32 %v1669, %v2386
    %v2476 = vadd.f32 %v1671, %v2390
    %v2477 = vadd.f32 %v1782, %v2394
    %v2478 = vadd.f32 %v1784, %v2398
    %v2479 = vadd.f32 %v1447, %v2370
    %v2480 = vadd.f32 %v1449, %v2374
    %v2481 = vadd.f32 %v1560, %v2378
    %v2482 = vadd.f32 %v1562, %v2382
    %v2483 = vadd.f32 %v1673, %v2386
    %v2484 = vadd.f32 %v1675, %v2390
    %v2485 = vadd.f32 %v1786, %v2394
    %v2486 = vadd.f32 %v1788, %v2398
    %v2487 = vadd.f32 %v1453, %v2370
    %v2488 = vadd.f32 %v1455, %v2374
    %v2489 = vadd.f32 %v1566, %v2378
    %v2490 = vadd.f32 %v1568, %v2382
    %v2491 = vadd.f32 %v1679, %v2386
    %v2492 = vadd.f32 %v1681, %v2390
    %v2493 = vadd.f32 %v1792, %v2394
    %v2494 = vadd.f32 %v1794, %v2398
    %v2495 = vadd.f32 %v1457, %v2370
    %v2496 = vadd.f32 %v1459, %v2374
    %v2497 = vadd.f32 %v1570, %v2378
    %v2498 = vadd.f32 %v1572, %v2382
    %v2499 = vadd.f32 %v1683, %v2386
    %v2500 = vadd.f32 %v1685, %v2390
    %v2501 = vadd.f32 %v1796, %v2394
    %v2502 = vadd.f32 %v1798, %v2398
    %v2503 = vadd.f32 %v1463, %v2370
    %v2504 = vadd.f32 %v1465, %v2374
    %v2505 = vadd.f32 %v1576, %v2378
    %v2506 = vadd.f32 %v1578, %v2382
    %v2507 = vadd.f32 %v1689, %v2386
    %v2508 = vadd.f32 %v1691, %v2390
    %v2509 = vadd.f32 %v1802, %v2394
    %v2510 = vadd.f32 %v1804, %v2398
    %v2511 = vadd.f32 %v1467, %v2370
    %v2512 = vadd.f32 %v1469, %v2374
    %v2513 = vadd.f32 %v1580, %v2378
    %v2514 = vadd.f32 %v1582, %v2382
    %v2515 = vadd.f32 %v1693, %v2386
    %v2516 = vadd.f32 %v1695, %v2390
    %v2517 = vadd.f32 %v1806, %v2394
    %v2518 = vadd.f32 %v1808, %v2398
    %v2519 = vadd.f32 %v1473, %v2370
    %v2520 = vadd.f32 %v1475, %v2374
    %v2521 = vadd.f32 %v1586, %v2378
    %v2522 = vadd.f32 %v1588, %v2382
    %v2523 = vadd.f32 %v1699, %v2386
    %v2524 = vadd.f32 %v1701, %v2390
    %v2525 = vadd.f32 %v1812, %v2394
    %v2526 = vadd.f32 %v1814, %v2398
    %v2527 = vadd.f32 %v1477, %v2370
    %v2528 = vadd.f32 %v1479, %v2374
    %v2529 = vadd.f32 %v1590, %v2378
    %v2530 = vadd.f32 %v1592, %v2382
    %v2531 = vadd.f32 %v1703, %v2386
    %v2532 = vadd.f32 %v1705, %v2390
    %v2533 = vadd.f32 %v1816, %v2394
    %v2534 = vadd.f32 %v1818, %v2398
    %2535 = vst [vmem:[#allocation4] sm:$0xff] %v2407
    %2536 = vst [vmem:[#allocation4 + $0x8] sm:$0xff] %v2408
    %2537 = vst [vmem:[#allocation4 + $0x10] sm:$0xff] %v2409
    %2538 = vst [vmem:[#allocation4 + $0x18] sm:$0xff] %v2410
    %2539 = vst [vmem:[#allocation4 + $0x20] sm:$0xff] %v2411
    %2540 = vst [vmem:[#allocation4 + $0x28] sm:$0xff] %v2412
    %2541 = vst [vmem:[#allocation4 + $0x30] sm:$0xff] %v2413
    %2542 = vst [vmem:[#allocation4 + $0x38] sm:$0xff] %v2414
    %2543 = vst [vmem:[#allocation4 + $0x40] sm:$0xff] %v2415
    %2544 = vst [vmem:[#allocation4 + $0x48] sm:$0xff] %v2416
    %2545 = vst [vmem:[#allocation4 + $0x50] sm:$0xff] %v2417
    %2546 = vst [vmem:[#allocation4 + $0x58] sm:$0xff] %v2418
    %2547 = vst [vmem:[#allocation4 + $0x60] sm:$0xff] %v2419
    %2548 = vst [vmem:[#allocation4 + $0x68] sm:$0xff] %v2420
    %2549 = vst [vmem:[#allocation4 + $0x70] sm:$0xff] %v2421
    %2550 = vst [vmem:[#allocation4 + $0x78] sm:$0xff] %v2422
    %2551 = vst [vmem:[#allocation4 + $0x80] sm:$0xff] %v2423
    %2552 = vst [vmem:[#allocation4 + $0x88] sm:$0xff] %v2424
    %2553 = vst [vmem:[#allocation4 + $0x90] sm:$0xff] %v2425
    %2554 = vst [vmem:[#allocation4 + $0x98] sm:$0xff] %v2426
    %2555 = vst [vmem:[#allocation4 + $0xa0] sm:$0xff] %v2427
    %2556 = vst [vmem:[#allocation4 + $0xa8] sm:$0xff] %v2428
    %2557 = vst [vmem:[#allocation4 + $0xb0] sm:$0xff] %v2429
    %2558 = vst [vmem:[#allocation4 + $0xb8] sm:$0xff] %v2430
    %2559 = vst [vmem:[#allocation4 + $0xc0] sm:$0xff] %v2431
    %2560 = vst [vmem:[#allocation4 + $0xc8] sm:$0xff] %v2432
    %2561 = vst [vmem:[#allocation4 + $0xd0] sm:$0xff] %v2433
    %2562 = vst [vmem:[#allocation4 + $0xd8] sm:$0xff] %v2434
    %2563 = vst [vmem:[#allocation4 + $0xe0] sm:$0xff] %v2435
    %2564 = vst [vmem:[#allocation4 + $0xe8] sm:$0xff] %v2436
    %2565 = vst [vmem:[#allocation4 + $0xf0] sm:$0xff] %v2437
    %2566 = vst [vmem:[#allocation4 + $0xf8] sm:$0xff] %v2438
    %2567 = vst [vmem:[#allocation4 + $0x100] sm:$0xff] %v2439
    %2568 = vst [vmem:[#allocation4 + $0x108] sm:$0xff] %v2440
    %2569 = vst [vmem:[#allocation4 + $0x110] sm:$0xff] %v2441
    %2570 = vst [vmem:[#allocation4 + $0x118] sm:$0xff] %v2442
    %2571 = vst [vmem:[#allocation4 + $0x120] sm:$0xff] %v2443
    %2572 = vst [vmem:[#allocation4 + $0x128] sm:$0xff] %v2444
    %2573 = vst [vmem:[#allocation4 + $0x130] sm:$0xff] %v2445
    %2574 = vst [vmem:[#allocation4 + $0x138] sm:$0xff] %v2446
    %2575 = vst [vmem:[#allocation4 + $0x140] sm:$0xff] %v2447
    %2576 = vst [vmem:[#allocation4 + $0x148] sm:$0xff] %v2448
    %2577 = vst [vmem:[#allocation4 + $0x150] sm:$0xff] %v2449
    %2578 = vst [vmem:[#allocation4 + $0x158] sm:$0xff] %v2450
    %2579 = vst [vmem:[#allocation4 + $0x160] sm:$0xff] %v2451
    %2580 = vst [vmem:[#allocation4 + $0x168] sm:$0xff] %v2452
    %2581 = vst [vmem:[#allocation4 + $0x170] sm:$0xff] %v2453
    %2582 = vst [vmem:[#allocation4 + $0x178] sm:$0xff] %v2454
    %2583 = vst [vmem:[#allocation4 + $0x180] sm:$0xff] %v2455
    %2584 = vst [vmem:[#allocation4 + $0x188] sm:$0xff] %v2456
    %2585 = vst [vmem:[#allocation4 + $0x190] sm:$0xff] %v2457
    %2586 = vst [vmem:[#allocation4 + $0x198] sm:$0xff] %v2458
    %2587 = vst [vmem:[#allocation4 + $0x1a0] sm:$0xff] %v2459
    %2588 = vst [vmem:[#allocation4 + $0x1a8] sm:$0xff] %v2460
    %2589 = vst [vmem:[#allocation4 + $0x1b0] sm:$0xff] %v2461
    %2590 = vst [vmem:[#allocation4 + $0x1b8] sm:$0xff] %v2462
    %2591 = vst [vmem:[#allocation4 + $0x1c0] sm:$0xff] %v2463
    %2592 = vst [vmem:[#allocation4 + $0x1c8] sm:$0xff] %v2464
    %2593 = vst [vmem:[#allocation4 + $0x1d0] sm:$0xff] %v2465
    %2594 = vst [vmem:[#allocation4 + $0x1d8] sm:$0xff] %v2466
    %2595 = vst [vmem:[#allocation4 + $0x1e0] sm:$0xff] %v2467
    %2596 = vst [vmem:[#allocation4 + $0x1e8] sm:$0xff] %v2468
    %2597 = vst [vmem:[#allocation4 + $0x1f0] sm:$0xff] %v2469
    %2598 = vst [vmem:[#allocation4 + $0x1f8] sm:$0xff] %v2470
    %2599 = vst [vmem:[#allocation4 + $0x200] sm:$0xff] %v2471
    %2600 = vst [vmem:[#allocation4 + $0x208] sm:$0xff] %v2472
    %2601 = vst [vmem:[#allocation4 + $0x210] sm:$0xff] %v2473
    %2602 = vst [vmem:[#allocation4 + $0x218] sm:$0xff] %v2474
    %2603 = vst [vmem:[#allocation4 + $0x220] sm:$0xff] %v2475
    %2604 = vst [vmem:[#allocation4 + $0x228] sm:$0xff] %v2476
    %2605 = vst [vmem:[#allocation4 + $0x230] sm:$0xff] %v2477
    %2606 = vst [vmem:[#allocation4 + $0x238] sm:$0xff] %v2478
    %2607 = vst [vmem:[#allocation4 + $0x240] sm:$0xff] %v2479
    %2608 = vst [vmem:[#allocation4 + $0x248] sm:$0xff] %v2480
    %2609 = vst [vmem:[#allocation4 + $0x250] sm:$0xff] %v2481
    %2610 = vst [vmem:[#allocation4 + $0x258] sm:$0xff] %v2482
    %2611 = vst [vmem:[#allocation4 + $0x260] sm:$0xff] %v2483
    %2612 = vst [vmem:[#allocation4 + $0x268] sm:$0xff] %v2484
    %2613 = vst [vmem:[#allocation4 + $0x270] sm:$0xff] %v2485
    %2614 = vst [vmem:[#allocation4 + $0x278] sm:$0xff] %v2486
    %2615 = vst [vmem:[#allocation4 + $0x280] sm:$0xff] %v2487
    %2616 = vst [vmem:[#allocation4 + $0x288] sm:$0xff] %v2488
    %2617 = vst [vmem:[#allocation4 + $0x290] sm:$0xff] %v2489
    %2618 = vst [vmem:[#allocation4 + $0x298] sm:$0xff] %v2490
    %2619 = vst [vmem:[#allocation4 + $0x2a0] sm:$0xff] %v2491
    %2620 = vst [vmem:[#allocation4 + $0x2a8] sm:$0xff] %v2492
    %2621 = vst [vmem:[#allocation4 + $0x2b0] sm:$0xff] %v2493
    %2622 = vst [vmem:[#allocation4 + $0x2b8] sm:$0xff] %v2494
    %2623 = vst [vmem:[#allocation4 + $0x2c0] sm:$0xff] %v2495
    %2624 = vst [vmem:[#allocation4 + $0x2c8] sm:$0xff] %v2496
    %2625 = vst [vmem:[#allocation4 + $0x2d0] sm:$0xff] %v2497
    %2626 = vst [vmem:[#allocation4 + $0x2d8] sm:$0xff] %v2498
    %2627 = vst [vmem:[#allocation4 + $0x2e0] sm:$0xff] %v2499
    %2628 = vst [vmem:[#allocation4 + $0x2e8] sm:$0xff] %v2500
    %2629 = vst [vmem:[#allocation4 + $0x2f0] sm:$0xff] %v2501
    %2630 = vst [vmem:[#allocation4 + $0x2f8] sm:$0xff] %v2502
    %2631 = vst [vmem:[#allocation4 + $0x300] sm:$0xff] %v2503
    %2632 = vst [vmem:[#allocation4 + $0x308] sm:$0xff] %v2504
    %2633 = vst [vmem:[#allocation4 + $0x310] sm:$0xff] %v2505
    %2634 = vst [vmem:[#allocation4 + $0x318] sm:$0xff] %v2506
    %2635 = vst [vmem:[#allocation4 + $0x320] sm:$0xff] %v2507
    %2636 = vst [vmem:[#allocation4 + $0x328] sm:$0xff] %v2508
    %2637 = vst [vmem:[#allocation4 + $0x330] sm:$0xff] %v2509
    %2638 = vst [vmem:[#allocation4 + $0x338] sm:$0xff] %v2510
    %2639 = vst [vmem:[#allocation4 + $0x340] sm:$0xff] %v2511
    %2640 = vst [vmem:[#allocation4 + $0x348] sm:$0xff] %v2512
    %2641 = vst [vmem:[#allocation4 + $0x350] sm:$0xff] %v2513
    %2642 = vst [vmem:[#allocation4 + $0x358] sm:$0xff] %v2514
    %2643 = vst [vmem:[#allocation4 + $0x360] sm:$0xff] %v2515
    %2644 = vst [vmem:[#allocation4 + $0x368] sm:$0xff] %v2516
    %2645 = vst [vmem:[#allocation4 + $0x370] sm:$0xff] %v2517
    %2646 = vst [vmem:[#allocation4 + $0x378] sm:$0xff] %v2518
    %2647 = vst [vmem:[#allocation4 + $0x380] sm:$0xff] %v2519
    %2648 = vst [vmem:[#allocation4 + $0x388] sm:$0xff] %v2520
    %2649 = vst [vmem:[#allocation4 + $0x390] sm:$0xff] %v2521
    %2650 = vst [vmem:[#allocation4 + $0x398] sm:$0xff] %v2522
    %2651 = vst [vmem:[#allocation4 + $0x3a0] sm:$0xff] %v2523
    %2652 = vst [vmem:[#allocation4 + $0x3a8] sm:$0xff] %v2524
    %2653 = vst [vmem:[#allocation4 + $0x3b0] sm:$0xff] %v2525
    %2654 = vst [vmem:[#allocation4 + $0x3b8] sm:$0xff] %v2526
    %2655 = vst [vmem:[#allocation4 + $0x3c0] sm:$0xff] %v2527
    %2656 = vst [vmem:[#allocation4 + $0x3c8] sm:$0xff] %v2528
    %2657 = vst [vmem:[#allocation4 + $0x3d0] sm:$0xff] %v2529
    %2658 = vst [vmem:[#allocation4 + $0x3d8] sm:$0xff] %v2530
    %2659 = vst [vmem:[#allocation4 + $0x3e0] sm:$0xff] %v2531
    %2660 = vst [vmem:[#allocation4 + $0x3e8] sm:$0xff] %v2532
    %2661 = vst [vmem:[#allocation4 + $0x3f0] sm:$0xff] %v2533
    %2662 = vst [vmem:[#allocation4 + $0x3f8] sm:$0xff] %v2534
    %vm2663 = vcmask 130048
    %2664 = vst.msk [vmem:[%s5] sm:$0xff] %vm2663, %v1855
    %2665 = vst.msk [vmem:[%s5 + $0x8] sm:$0xff] %vm2663, %v1858
    %2666 = vst.msk [vmem:[%s5 + $0x10] sm:$0xff] %vm2663, %v1863
    %2667 = vst.msk [vmem:[%s5 + $0x18] sm:$0xff] %vm2663, %v1866
    %2668 = vst.msk [vmem:[%s5 + $0x20] sm:$0xff] %vm2663, %v1871
    %2669 = vst.msk [vmem:[%s5 + $0x28] sm:$0xff] %vm2663, %v1874
    %2670 = vst.msk [vmem:[%s5 + $0x30] sm:$0xff] %vm2663, %v1879
    %2671 = vst.msk [vmem:[%s5 + $0x38] sm:$0xff] %vm2663, %v1882
    %2672 = vst.msk [vmem:[%s5 + $0x40] sm:$0xff] %vm2663, %v1887
    %2673 = vst.msk [vmem:[%s5 + $0x48] sm:$0xff] %vm2663, %v1890
    %2674 = vst.msk [vmem:[%s5 + $0x50] sm:$0xff] %vm2663, %v1895
    %2675 = vst.msk [vmem:[%s5 + $0x58] sm:$0xff] %vm2663, %v1898
    %2676 = vst.msk [vmem:[%s5 + $0x60] sm:$0xff] %vm2663, %v1903
    %2677 = vst.msk [vmem:[%s5 + $0x68] sm:$0xff] %vm2663, %v1906
    %2678 = vst.msk [vmem:[%s5 + $0x70] sm:$0xff] %vm2663, %v1911
    %2679 = vst.msk [vmem:[%s5 + $0x78] sm:$0xff] %vm2663, %v1914
    // Predicated region
    $region14: #{tpu_custom_call.1} parent=1 // pred_check
      _
    $region15: #{tpu_custom_call.1} parent=1 // pred_check_branch
      %2681 = sbr.rel (0) target = $region17
    $region16: #{tpu_custom_call.1} parent=1 // pred_region
      %s2683 = ssub.s32 8192, 8192
      %2684 = vsyncadd [#allocation3], %s2683
      %s2685 = sshll.u32 [#allocation2], 4
      %s2686 = int_to_ptr.vmem [resolvable:$true] %s2685
      %2691 = dma.vmem_to_hbm [thread:$0]  %s2686, 8192, %s3, [#allocation3], 512, 512, 32
    $region17: #{tpu_custom_call.1} parent=1 // pred_fallthru
      _
    // Predicated region
    $region18: #{tpu_custom_call.1} parent=1 // pred_check
      _
    $region19: #{tpu_custom_call.1} parent=1 // pred_check_branch
      %2693 = sbr.rel (0) target = $region21
    $region20: #{tpu_custom_call.1} parent=1 // pred_region
      %s2695 = ssub.s32 16384, 16384
      %2696 = vsyncadd [#allocation5], %s2695
      %s2697 = sshll.u32 [#allocation4], 4
      %s2698 = int_to_ptr.vmem [resolvable:$true] %s2697
      %2703 = dma.vmem_to_hbm [thread:$0]  %s2698, 16384, %s4, [#allocation5], 1024, 1024, 64
    $region21: #{tpu_custom_call.1} parent=1 // pred_fallthru
      _
    // Predicated region
    $region22: #{tpu_custom_call.1} parent=1 // pred_check
      _
    $region23: #{tpu_custom_call.1} parent=1 // pred_check_branch
      %2705 = sbr.rel (0) target = $region25
    $region24: #{tpu_custom_call.1} parent=1 // pred_region
      _
    $region25: #{tpu_custom_call.1} parent=1 // pred_fallthru
      _
    // Predicated region
    $region26: #{tpu_custom_call.1} parent=1 // pred_check
      _
    $region27: #{tpu_custom_call.1} parent=1 // pred_check_branch
      %2707 = sbr.rel (0) target = $region29
    $region28: #{tpu_custom_call.1} parent=1 // pred_region
      %2708 = dma.done [#allocation3], 8192
    $region29: #{tpu_custom_call.1} parent=1 // pred_fallthru
      _
    // Predicated region
    $region30: #{tpu_custom_call.1} parent=1 // pred_check
      _
    $region31: #{tpu_custom_call.1} parent=1 // pred_check_branch
      %2710 = sbr.rel (0) target = $region33
    $region32: #{tpu_custom_call.1} parent=1 // pred_region
      %2711 = dma.done [#allocation5], 16384
    $region33: #{tpu_custom_call.1} parent=1 // pred_fallthru
      _
    // Predicated region
    $region34: #{tpu_custom_call.1} parent=1 // pred_check
      _
    $region35: #{tpu_custom_call.1} parent=1 // pred_check_branch
      %2713 = sbr.rel (0) target = $region37
    $region36: #{tpu_custom_call.1} parent=1 // pred_region
      _
    $region37: #{tpu_custom_call.1} parent=1 // pred_fallthru
      _
    %2714 = vsyncpa [#allocation3], 1
    %2715 = vsyncpa [#allocation5], 1

</llo_original>
